<compile_context>
chip_gen: v5e
topology: v5e:2x2
jax: 0.10.0
libtpu: 0.0.40
codegen_flags: <defaults>
</compile_context>

<pallas_src>
import functools

import jax
import jax.numpy as jnp
from jax.experimental import pallas as pl
from jax.experimental.pallas import tpu as pltpu


# ----------------------------------------------------------------------------
# In-kernel helpers
# ----------------------------------------------------------------------------

def _leaky(x):
    return jnp.where(x >= 0, x, 0.1 * x)


def _conv3x3_gemm(x, w_ref, bias, pad_ref, slab_ref, m_left, m_right,
                  W, left, gemm_dtype):
    """3x3 'same' conv (+ any fused extra rows) on a (Cin, HW) activation.

    The activation is staged into the halo-padded flat scratch (halos were zeroed
    once at kernel start), the 9 shifted taps are copied into a (9*Cin, HW) slab
    (dx=+-1 taps get the W-border mask fused into the copy) and a SINGLE MXU
    matmul against the tap-fused weight w_ref (Rows, 9*Cin) produces the result.
    """
    cin, HW = x.shape
    k = 9 * cin
    # Stage interior only (halo columns already zero).
    pad_ref[0:cin, left:left + HW] = x
    t = 0
    for dy in (-1, 0, 1):
        for dx in (-1, 0, 1):
            base = left + dy * W + dx              # static slice start
            xs = pad_ref[0:cin, base:base + HW]
            if dx == -1:
                xs = xs * m_left                   # kill W-wrap of left taps
            elif dx == 1:
                xs = xs * m_right                  # kill W-wrap of right taps
            slab_ref[t * cin:(t + 1) * cin, :] = xs.astype(gemm_dtype)
            t += 1
    acc = jnp.dot(w_ref[...], slab_ref[0:k, :],
                  preferred_element_type=jnp.float32)
    return acc + bias


def _unet_block(x, w1_ref, w2_ref, vec_ref, cout, half,
                pad_ref, slab_ref, m_left, m_right, W, left, gemm_dtype):
    """UNetConvBlock: conv1 (+fused 1x1 identity rows) -> HIN(first `half` rows)
    -> lrelu -> conv2 -> lrelu -> + identity."""
    b1 = vec_ref[0:2 * cout]                       # conv1 bias ++ identity bias
    b2 = vec_ref[2 * cout:3 * cout]
    g = vec_ref[3 * cout:3 * cout + half]
    bn = vec_ref[3 * cout + half:3 * cout + 2 * half]

    z = _conv3x3_gemm(x, w1_ref, b1, pad_ref, slab_ref, m_left, m_right,
                      W, left, gemm_dtype)         # (2*cout, HW)
    out = z[0:cout]
    ident = z[cout:2 * cout]

    # Half-instance-norm on the first `half` rows only (biased var, eps=1e-5).
    o1 = out[0:half]
    mean = jnp.mean(o1, axis=-1, keepdims=True)
    var = jnp.mean((o1 - mean) ** 2, axis=-1, keepdims=True)
    o1 = (o1 - mean) * jax.lax.rsqrt(var + 1e-5) * g + bn
    out = _leaky(jnp.concatenate([o1, out[half:cout]], axis=0))

    out = _leaky(_conv3x3_gemm(out, w2_ref, b2, pad_ref, slab_ref,
                               m_left, m_right, W, left, gemm_dtype))
    return out + ident


def _spa_kernel(x_ref,
                f_w1, f_w2, f_vec, hg_w1, hg_w2, hg_vec,
                o_ref, pad_ref, slab_ref,
                *, H, W, s1, s2, clamp, left, gemm_dtype):
    HW = H * W
    cmax = pad_ref.shape[0]
    # Zero only the halo columns, once per grid step, for ALL cmax rows.
    pad_ref[0:cmax, left - W - 1:left] = jnp.zeros((cmax, W + 1), jnp.float32)
    pad_ref[0:cmax, left + HW:left + HW + W + 1] = (
        jnp.zeros((cmax, W + 1), jnp.float32))

    x = x_ref[0]                                   # (nc, HW), spatial on lanes
    x1 = x[0:s1]
    x2 = x[s1:s1 + s2]

    # W-border masks shared by all four convolutions.
    col = jax.lax.broadcasted_iota(jnp.int32, (1, HW), 1) % W
    m_left = (col >= 1).astype(jnp.float32)        # dx = -1 taps
    m_right = (col <= W - 2).astype(jnp.float32)   # dx = +1 taps

    # F block and y1 = x1 + F(x2)
    fx2 = _unet_block(x2, f_w1, f_w2, f_vec, cout=s1, half=s1 // 2,
                      pad_ref=pad_ref, slab_ref=slab_ref,
                      m_left=m_left, m_right=m_right, W=W, left=left,
                      gemm_dtype=gemm_dtype)
    y1 = x1 + fx2

    # Fused H+G block on y1: output rows [0:s2] = H(y1), [s2:2*s2] = G(y1).
    hg = _unet_block(y1, hg_w1, hg_w2, hg_vec, cout=2 * s2, half=2 * (s2 // 2),
                     pad_ref=pad_ref, slab_ref=slab_ref,
                     m_left=m_left, m_right=m_right, W=W, left=left,
                     gemm_dtype=gemm_dtype)
    h_out = hg[0:s2]
    g_out = hg[s2:2 * s2]

    # Affine coupling + SpaBlock residual:  out = x + cat(y1, y2).
    s = clamp * (2.0 * jax.nn.sigmoid(h_out) - 1.0)
    y2 = x2 * jnp.exp(s) + g_out
    o_ref[0] = x + jnp.concatenate([y1, y2], axis=0)   # one full-block store


# ----------------------------------------------------------------------------
# pallas_call wrapper
# ----------------------------------------------------------------------------

def spa_block(x_nchw, packed):
    """SpaBlock forward as a single fused Pallas TPU kernel.

    x_nchw: (N, nc, H, W) f32.   packed: output of pack_spa_params(params).
    """
    N, nc, H, W = x_nchw.shape
    s1 = nc // 2
    s2 = nc - s1
    HW = H * W
    left = ((W + 1 + 127) // 128) * 128            # 128-aligned interior start
    pad_len = left + HW + W + 1
    cmax_in = max(s1, s2, 2 * s2)                  # largest conv input channels
    gemm_dtype = packed["F"]["w1"].dtype

    xr = x_nchw.reshape(N, nc, HW)                 # NCHW is already channel-major
    weights = [packed["F"]["w1"], packed["F"]["w2"], packed["F"]["vec"],
               packed["HG"]["w1"], packed["HG"]["w2"], packed["HG"]["vec"]]

    def _wspec(a):
        # Tiny weight kept resident in VMEM via a constant index_map.
        return pl.BlockSpec(a.shape, lambda n, _nd=a.ndim: (0,) * _nd)

    out = pl.pallas_call(
        functools.partial(_spa_kernel, H=H, W=W, s1=s1, s2=s2, clamp=0.8,
                          left=left, gemm_dtype=gemm_dtype),
        grid=(N,),
        in_specs=[pl.BlockSpec((1, nc, HW), lambda n: (n, 0, 0))]
                 + [_wspec(a) for a in weights],
        out_specs=pl.BlockSpec((1, nc, HW), lambda n: (n, 0, 0)),
        out_shape=jax.ShapeDtypeStruct((N, nc, HW), jnp.float32),
        scratch_shapes=[pltpu.VMEM((cmax_in, pad_len), jnp.float32),  # halo staging
                        pltpu.VMEM((9 * cmax_in, HW), gemm_dtype)],   # im2col slab
        compiler_params=pltpu.CompilerParams(
            dimension_semantics=("parallel",)),
    )(xr, *weights)
    return out.reshape(N, nc, H, W)


# ----------------------------------------------------------------------------
# One-time weight packing (tap-fused GEMM weights, fused identity, fused H+G)
# ----------------------------------------------------------------------------

def _fuse_taps(w):
    # (Cout, Cin, 3, 3) -> (Cout, 9*Cin); column index = (ky*3 + kx)*Cin + ci,
    # matching the slab row order built in _conv3x3_gemm.
    co, ci = w.shape[0], w.shape[1]
    return jnp.transpose(w, (0, 2, 3, 1)).reshape(co, 9 * ci)


def _pack_block(c1_w, c1_b, c2_w, c2_b, id_w, id_b, norm_g, norm_b, gemm_dtype):
    co, ci = c1_w.shape[0], c1_w.shape[1]
    half = co // 2
    # conv1 taps + 1x1 identity embedded in the centre-tap columns as extra rows.
    wid = id_w.reshape(co, ci)
    id_rows = jnp.zeros((co, 9 * ci), jnp.float32).at[:, 4 * ci:5 * ci].set(wid)
    w1 = jnp.concatenate([_fuse_taps(c1_w), id_rows], axis=0).astype(gemm_dtype)
    w2 = _fuse_taps(c2_w).astype(gemm_dtype)
    vec = jnp.concatenate([c1_b, id_b, c2_b, norm_g, norm_b]).reshape(-1, 1)
    assert norm_g.shape[0] == half and vec.shape[0] == 3 * co + 2 * half
    return dict(w1=w1, w2=w2, vec=vec.astype(jnp.float32))


def _pack_f(p, gemm_dtype):
    return _pack_block(p["c1_w"], p["c1_b"], p["c2_w"], p["c2_b"],
                       p["id_w"], p["id_b"], p["norm_g"], p["norm_b"], gemm_dtype)


def _pack_hg(p_h, p_g, gemm_dtype):
    """Fuse H and G (same input y1) into one UNet block of width 2*s2.

    conv1 output channels are permuted to [H_hin, G_hin, H_rest, G_rest] so the HIN
    rows are contiguous; conv2 is block-diagonal with input channels permuted to
    match; conv2 outputs and the fused identity rows stay in [H, G] order so the
    kernel splits h_out / g_out with static slices.  Requires even out_size (as the
    PyTorch module effectively does via InstanceNorm2d(out_size // 2)).
    """
    s2 = p_h["c1_w"].shape[0]
    h = s2 // 2
    perm = jnp.array(list(range(0, h)) + list(range(s2, s2 + h)) +
                     list(range(h, s2)) + list(range(s2 + h, 2 * s2)))
    c1_w = jnp.concatenate([p_h["c1_w"], p_g["c1_w"]], axis=0)[perm]
    c1_b = jnp.concatenate([p_h["c1_b"], p_g["c1_b"]])[perm]
    z = jnp.zeros((s2, s2, 3, 3), jnp.float32)
    c2_w = jnp.concatenate(
        [jnp.concatenate([p_h["c2_w"], z], axis=1),
         jnp.concatenate([z, p_g["c2_w"]], axis=1)], axis=0)[:, perm]
    c2_b = jnp.concatenate([p_h["c2_b"], p_g["c2_b"]])
    id_w = jnp.concatenate([p_h["id_w"], p_g["id_w"]], axis=0)
    id_b = jnp.concatenate([p_h["id_b"], p_g["id_b"]])
    norm_g = jnp.concatenate([p_h["norm_g"], p_g["norm_g"]])
    norm_b = jnp.concatenate([p_h["norm_b"], p_g["norm_b"]])
    return _pack_block(c1_w, c1_b, c2_w, c2_b, id_w, id_b, norm_g, norm_b,
                       gemm_dtype)


def pack_spa_params(params, gemm_dtype=jnp.bfloat16):
    """One-time weight packing.  gemm_dtype=bf16 targets the v6e/v7x MXU; biases,
    HIN affine / statistics and the coupling math always stay f32."""
    return dict(F=_pack_f(params["F"], gemm_dtype),
                HG=_pack_hg(params["H"], params["G"], gemm_dtype))


# ----------------------------------------------------------------------------
# Deterministic parameter init (PyTorch-layout shapes)
# ----------------------------------------------------------------------------

def init_unet_block(key, in_size, out_size):
    ks = jax.random.split(key, 8)
    s = 0.1
    return dict(
        id_w=jax.random.normal(ks[0], (out_size, in_size, 1, 1), jnp.float32) * s,
        id_b=jax.random.normal(ks[1], (out_size,), jnp.float32) * s,
        c1_w=jax.random.normal(ks[2], (out_size, in_size, 3, 3), jnp.float32) * s,
        c1_b=jax.random.normal(ks[3], (out_size,), jnp.float32) * s,
        c2_w=jax.random.normal(ks[4], (out_size, out_size, 3, 3), jnp.float32) * s,
        c2_b=jax.random.normal(ks[5], (out_size,), jnp.float32) * s,
        norm_g=1.0 + jax.random.normal(ks[6], (out_size // 2,), jnp.float32) * s,
        norm_b=jax.random.normal(ks[7], (out_size // 2,), jnp.float32) * s,
    )


# ----------------------------------------------------------------------------
# Pure-JAX reference (faithful to the PyTorch module) for the correctness check
# ----------------------------------------------------------------------------

def _conv_ref(x, w, b):
    pad = "SAME" if w.shape[-1] == 3 else "VALID"
    out = jax.lax.conv_general_dilated(
        x, w, window_strides=(1, 1), padding=pad,
        dimension_numbers=("NCHW", "OIHW", "NCHW"),
        precision=jax.lax.Precision.HIGHEST)
    return out + b.reshape(1, -1, 1, 1)


def _leaky_ref(x):
    return jnp.where(x >= 0, x, 0.1 * x)


def _unet_ref(x, p):
    out = _conv_ref(x, p["c1_w"], p["c1_b"])
    half = out.shape[1] // 2
    o1, o2 = out[:, :half], out[:, half:]
    mean = o1.mean(axis=(2, 3), keepdims=True)
    var = ((o1 - mean) ** 2).mean(axis=(2, 3), keepdims=True)
    o1 = (o1 - mean) * jax.lax.rsqrt(var + 1e-5)
    o1 = o1 * p["norm_g"].reshape(1, -1, 1, 1) + p["norm_b"].reshape(1, -1, 1, 1)
    out = _leaky_ref(jnp.concatenate([o1, o2], axis=1))
    out = _leaky_ref(_conv_ref(out, p["c2_w"], p["c2_b"]))
    return out + _conv_ref(x, p["id_w"], p["id_b"])


def spa_block_ref(x, params):
    nc = x.shape[1]
    s1 = nc // 2
    x1, x2 = x[:, :s1], x[:, s1:]
    y1 = x1 + _unet_ref(x2, params["F"])
    s = 0.8 * (jax.nn.sigmoid(_unet_ref(y1, params["H"])) * 2.0 - 1.0)
    y2 = x2 * jnp.exp(s) + _unet_ref(y1, params["G"])
    return x + jnp.concatenate([y1, y2], axis=1)


# ----------------------------------------------------------------------------
# Demo / self-test
# ----------------------------------------------------------------------------

if __name__ == "__main__":
    key = jax.random.PRNGKey(0)
    kx, kf, kg, kh = jax.random.split(key, 4)

    N, nc, H, W = 2, 4, 16, 16
    s1 = nc // 2
    s2 = nc - s1
    x = jax.random.normal(kx, (N, nc, H, W), jnp.float32)     # NCHW
    params = {
        "F": init_unet_block(kf, s2, s1),   # UNetConvBlock(split_len2, split_len1)
        "G": init_unet_block(kg, s1, s2),   # UNetConvBlock(split_len1, split_len2)
        "H": init_unet_block(kh, s1, s2),   # UNetConvBlock(split_len1, split_len2)
    }
    ref = spa_block_ref(x, params)

    # f32 GEMM operands: tight check of the fused-kernel math.
    packed_f32 = pack_spa_params(params, gemm_dtype=jnp.float32)
    out_f32 = jax.block_until_ready(jax.jit(spa_block)(x, packed_f32))
    assert out_f32.shape == x.shape and out_f32.dtype == jnp.float32
    assert bool(jnp.all(jnp.isfinite(out_f32)))
    err_f32 = float(jnp.max(jnp.abs(out_f32 - ref)))
    assert err_f32 < 5e-2, f"f32 kernel/reference mismatch: max|diff|={err_f32}"

    # bf16 GEMM operands (v6e/v7x MXU); accumulation / HIN / sigmoid / exp stay f32.
    packed_bf16 = pack_spa_params(params, gemm_dtype=jnp.bfloat16)
    out_bf16 = jax.block_until_ready(jax.jit(spa_block)(x, packed_bf16))
    assert bool(jnp.all(jnp.isfinite(out_bf16)))
    err_bf16 = float(jnp.max(jnp.abs(out_bf16 - ref)))
    assert err_bf16 < 1.5e-1, f"bf16 kernel/reference mismatch: max|diff|={err_bf16}"

    print("KERNEL_OK")
</pallas_src>

<mosaic_0001>
module attributes {stable_mosaic.version = 11 : i64} {
  func.func @_spa_kernel(%arg0: i32, %arg1: memref<1x4x256xf32, #tpu.memory_space<vmem>>, %arg2: memref<4x18xf32, #tpu.memory_space<vmem>>, %arg3: memref<2x18xf32, #tpu.memory_space<vmem>>, %arg4: memref<8x1xf32, #tpu.memory_space<vmem>>, %arg5: memref<8x18xf32, #tpu.memory_space<vmem>>, %arg6: memref<4x36xf32, #tpu.memory_space<vmem>>, %arg7: memref<16x1xf32, #tpu.memory_space<vmem>>, %arg8: memref<1x4x256xf32, #tpu.memory_space<vmem>>, %arg9: memref<4x401xf32, #tpu.memory_space<vmem>>, %arg10: memref<36x256xf32, #tpu.memory_space<vmem>>) attributes {dimension_semantics = [#tpu.dimension_semantics<parallel>], iteration_bounds = array<i64: 2>, scalar_prefetch = 0 : i64, scratch_operands = 2 : i64, tpu.core_type = #tpu.core_type<tc>, window_params = [{transform_indices = @transform_0, window_bounds = array<i64: 1, 4, 256>}, {pipeline_mode = #tpu.pipeline_mode<synchronous>, transform_indices = @transform_1, window_bounds = array<i64: 4, 18>}, {pipeline_mode = #tpu.pipeline_mode<synchronous>, transform_indices = @transform_2, window_bounds = array<i64: 2, 18>}, {pipeline_mode = #tpu.pipeline_mode<synchronous>, transform_indices = @transform_3, window_bounds = array<i64: 8, 1>}, {pipeline_mode = #tpu.pipeline_mode<synchronous>, transform_indices = @transform_4, window_bounds = array<i64: 8, 18>}, {pipeline_mode = #tpu.pipeline_mode<synchronous>, transform_indices = @transform_5, window_bounds = array<i64: 4, 36>}, {pipeline_mode = #tpu.pipeline_mode<synchronous>, transform_indices = @transform_6, window_bounds = array<i64: 16, 1>}, {transform_indices = @transform_7, window_bounds = array<i64: 1, 4, 256>}]} {
    %cst = arith.constant 0.000000e+00 : f32
    %0 = vector.broadcast %cst : f32 to vector<4x17xf32>
    %c0 = arith.constant 0 : index
    %c111 = arith.constant 111 : index
    %1 = vector.load %arg9[%c0, %c111] : memref<4x401xf32, #tpu.memory_space<vmem>>, vector<4x17xf32>
    tpu.vector_store %arg9[%c0, %c111], %0 {strides = array<i32>} : memref<4x401xf32, #tpu.memory_space<vmem>>, vector<4x17xf32>,
    %cst_0 = arith.constant 0.000000e+00 : f32
    %2 = vector.broadcast %cst_0 : f32 to vector<4x17xf32>
    %c0_1 = arith.constant 0 : index
    %c384 = arith.constant 384 : index
    %3 = vector.load %arg9[%c0_1, %c384] : memref<4x401xf32, #tpu.memory_space<vmem>>, vector<4x17xf32>
    tpu.vector_store %arg9[%c0_1, %c384], %2 {strides = array<i32>} : memref<4x401xf32, #tpu.memory_space<vmem>>, vector<4x17xf32>,
    %c0_2 = arith.constant 0 : index
    %c0_3 = arith.constant 0 : index
    %c0_4 = arith.constant 0 : index
    %4 = vector.load %arg1[%c0_2, %c0_3, %c0_4] : memref<1x4x256xf32, #tpu.memory_space<vmem>>, vector<1x4x256xf32>
    %5 = vector.shape_cast %4 : vector<1x4x256xf32> to vector<4x256xf32>
    %6 = vector.extract_strided_slice %5 {offsets = [0, 0], sizes = [2, 256], strides = [1, 1]} : vector<4x256xf32> to vector<2x256xf32>
    %7 = vector.extract_strided_slice %5 {offsets = [2, 0], sizes = [2, 256], strides = [1, 1]} : vector<4x256xf32> to vector<2x256xf32>
    %8 = tpu.iota {dimensions = array<i32: 1>} : vector<1x256xi32>
    %c16_i32 = arith.constant 16 : i32
    %c0_i32 = arith.constant 0 : i32
    %9 = arith.cmpi eq, %c16_i32, %c0_i32 : i32
    %c1_i32 = arith.constant 1 : i32
    %10 = arith.select %9, %c1_i32, %c16_i32 : i32
    %11 = vector.broadcast %10 : i32 to vector<1x256xi32>
    %12 = arith.remsi %8, %11 : vector<1x256xi32>
    %c0_i32_5 = arith.constant 0 : i32
    %13 = vector.broadcast %c0_i32_5 : i32 to vector<1x256xi32>
    %14 = arith.cmpi ne, %12, %13 : vector<1x256xi32>
    %c0_i32_6 = arith.constant 0 : i32
    %15 = vector.broadcast %c0_i32_6 : i32 to vector<1x256xi32>
    %16 = arith.cmpi slt, %12, %15 : vector<1x256xi32>
    %c0_i32_7 = arith.constant 0 : i32
    %17 = arith.cmpi slt, %10, %c0_i32_7 : i32
    %18 = vector.broadcast %17 : i1 to vector<1x256xi1>
    %19 = vector.broadcast %18 : vector<1x256xi1> to vector<1x256xi1>
    %20 = arith.xori %16, %19 : vector<1x256xi1>
    %21 = arith.andi %20, %14 : vector<1x256xi1>
    %22 = vector.broadcast %10 : i32 to vector<1x256xi32>
    %23 = arith.addi %12, %22 : vector<1x256xi32>
    %24 = arith.select %21, %23, %12 : vector<1x256xi1>, vector<1x256xi32>
    %c1_i32_8 = arith.constant 1 : i32
    %25 = vector.broadcast %c1_i32_8 : i32 to vector<1x256xi32>
    %26 = arith.cmpi sge, %24, %25 : vector<1x256xi32>
    %27 = arith.extui %26 : vector<1x256xi1> to vector<1x256xi32>
    %28 = arith.sitofp %27 : vector<1x256xi32> to vector<1x256xf32>
    %c14_i32 = arith.constant 14 : i32
    %29 = vector.broadcast %c14_i32 : i32 to vector<1x256xi32>
    %30 = arith.cmpi sle, %24, %29 : vector<1x256xi32>
    %31 = arith.extui %30 : vector<1x256xi1> to vector<1x256xi32>
    %32 = arith.sitofp %31 : vector<1x256xi32> to vector<1x256xf32>
    %c0_9 = arith.constant 0 : index
    %c0_10 = arith.constant 0 : index
    %33 = vector.load %arg4[%c0_9, %c0_10] : memref<8x1xf32, #tpu.memory_space<vmem>>, vector<4x1xf32>
    %c4 = arith.constant 4 : index
    %c0_11 = arith.constant 0 : index
    %34 = vector.load %arg4[%c4, %c0_11] : memref<8x1xf32, #tpu.memory_space<vmem>>, vector<2x1xf32>
    %c6 = arith.constant 6 : index
    %c0_12 = arith.constant 0 : index
    %35 = vector.load %arg4[%c6, %c0_12] : memref<8x1xf32, #tpu.memory_space<vmem>>, vector<1x1xf32>
    %c7 = arith.constant 7 : index
    %c0_13 = arith.constant 0 : index
    %36 = vector.load %arg4[%c7, %c0_13] : memref<8x1xf32, #tpu.memory_space<vmem>>, vector<1x1xf32>
    %c0_14 = arith.constant 0 : index
    %c128 = arith.constant 128 : index
    %37 = vector.load %arg9[%c0_14, %c128] : memref<4x401xf32, #tpu.memory_space<vmem>>, vector<2x256xf32>
    tpu.vector_store %arg9[%c0_14, %c128], %7 {strides = array<i32>} : memref<4x401xf32, #tpu.memory_space<vmem>>, vector<2x256xf32>,
    %c0_15 = arith.constant 0 : index
    %c111_16 = arith.constant 111 : index
    %38 = vector.load %arg9[%c0_15, %c111_16] : memref<4x401xf32, #tpu.memory_space<vmem>>, vector<2x256xf32>
    %39 = vector.broadcast %28 : vector<1x256xf32> to vector<2x256xf32>
    %40 = arith.mulf %38, %39 : vector<2x256xf32>
    %c0_17 = arith.constant 0 : index
    %c0_18 = arith.constant 0 : index
    %41 = vector.load %arg10[%c0_17, %c0_18] : memref<36x256xf32, #tpu.memory_space<vmem>>, vector<2x256xf32>
    tpu.vector_store %arg10[%c0_17, %c0_18], %40 {strides = array<i32>} : memref<36x256xf32, #tpu.memory_space<vmem>>, vector<2x256xf32>,
    %c0_19 = arith.constant 0 : index
    %c112 = arith.constant 112 : index
    %42 = vector.load %arg9[%c0_19, %c112] : memref<4x401xf32, #tpu.memory_space<vmem>>, vector<2x256xf32>
    %c2 = arith.constant 2 : index
    %c0_20 = arith.constant 0 : index
    %43 = vector.load %arg10[%c2, %c0_20] : memref<36x256xf32, #tpu.memory_space<vmem>>, vector<2x256xf32>
    tpu.vector_store %arg10[%c2, %c0_20], %42 {strides = array<i32>} : memref<36x256xf32, #tpu.memory_space<vmem>>, vector<2x256xf32>,
    %c0_21 = arith.constant 0 : index
    %c113 = arith.constant 113 : index
    %44 = vector.load %arg9[%c0_21, %c113] : memref<4x401xf32, #tpu.memory_space<vmem>>, vector<2x256xf32>
    %45 = vector.broadcast %32 : vector<1x256xf32> to vector<2x256xf32>
    %46 = arith.mulf %44, %45 : vector<2x256xf32>
    %c4_22 = arith.constant 4 : index
    %c0_23 = arith.constant 0 : index
    %47 = vector.load %arg10[%c4_22, %c0_23] : memref<36x256xf32, #tpu.memory_space<vmem>>, vector<2x256xf32>
    tpu.vector_store %arg10[%c4_22, %c0_23], %46 {strides = array<i32>} : memref<36x256xf32, #tpu.memory_space<vmem>>, vector<2x256xf32>,
    %c0_24 = arith.constant 0 : index
    %c127 = arith.constant 127 : index
    %48 = vector.load %arg9[%c0_24, %c127] : memref<4x401xf32, #tpu.memory_space<vmem>>, vector<2x256xf32>
    %49 = vector.broadcast %28 : vector<1x256xf32> to vector<2x256xf32>
    %50 = arith.mulf %48, %49 : vector<2x256xf32>
    %c6_25 = arith.constant 6 : index
    %c0_26 = arith.constant 0 : index
    %51 = vector.load %arg10[%c6_25, %c0_26] : memref<36x256xf32, #tpu.memory_space<vmem>>, vector<2x256xf32>
    tpu.vector_store %arg10[%c6_25, %c0_26], %50 {strides = array<i32>} : memref<36x256xf32, #tpu.memory_space<vmem>>, vector<2x256xf32>,
    %c0_27 = arith.constant 0 : index
    %c128_28 = arith.constant 128 : index
    %52 = vector.load %arg9[%c0_27, %c128_28] : memref<4x401xf32, #tpu.memory_space<vmem>>, vector<2x256xf32>
    %c8 = arith.constant 8 : index
    %c0_29 = arith.constant 0 : index
    %53 = vector.load %arg10[%c8, %c0_29] : memref<36x256xf32, #tpu.memory_space<vmem>>, vector<2x256xf32>
    tpu.vector_store %arg10[%c8, %c0_29], %52 {strides = array<i32>} : memref<36x256xf32, #tpu.memory_space<vmem>>, vector<2x256xf32>,
    %c0_30 = arith.constant 0 : index
    %c129 = arith.constant 129 : index
    %54 = vector.load %arg9[%c0_30, %c129] : memref<4x401xf32, #tpu.memory_space<vmem>>, vector<2x256xf32>
    %55 = vector.broadcast %32 : vector<1x256xf32> to vector<2x256xf32>
    %56 = arith.mulf %54, %55 : vector<2x256xf32>
    %c10 = arith.constant 10 : index
    %c0_31 = arith.constant 0 : index
    %57 = vector.load %arg10[%c10, %c0_31] : memref<36x256xf32, #tpu.memory_space<vmem>>, vector<2x256xf32>
    tpu.vector_store %arg10[%c10, %c0_31], %56 {strides = array<i32>} : memref<36x256xf32, #tpu.memory_space<vmem>>, vector<2x256xf32>,
    %c0_32 = arith.constant 0 : index
    %c143 = arith.constant 143 : index
    %58 = vector.load %arg9[%c0_32, %c143] : memref<4x401xf32, #tpu.memory_space<vmem>>, vector<2x256xf32>
    %59 = vector.broadcast %28 : vector<1x256xf32> to vector<2x256xf32>
    %60 = arith.mulf %58, %59 : vector<2x256xf32>
    %c12 = arith.constant 12 : index
    %c0_33 = arith.constant 0 : index
    %61 = vector.load %arg10[%c12, %c0_33] : memref<36x256xf32, #tpu.memory_space<vmem>>, vector<2x256xf32>
    tpu.vector_store %arg10[%c12, %c0_33], %60 {strides = array<i32>} : memref<36x256xf32, #tpu.memory_space<vmem>>, vector<2x256xf32>,
    %c0_34 = arith.constant 0 : index
    %c144 = arith.constant 144 : index
    %62 = vector.load %arg9[%c0_34, %c144] : memref<4x401xf32, #tpu.memory_space<vmem>>, vector<2x256xf32>
    %c14 = arith.constant 14 : index
    %c0_35 = arith.constant 0 : index
    %63 = vector.load %arg10[%c14, %c0_35] : memref<36x256xf32, #tpu.memory_space<vmem>>, vector<2x256xf32>
    tpu.vector_store %arg10[%c14, %c0_35], %62 {strides = array<i32>} : memref<36x256xf32, #tpu.memory_space<vmem>>, vector<2x256xf32>,
    %c0_36 = arith.constant 0 : index
    %c145 = arith.constant 145 : index
    %64 = vector.load %arg9[%c0_36, %c145] : memref<4x401xf32, #tpu.memory_space<vmem>>, vector<2x256xf32>
    %65 = vector.broadcast %32 : vector<1x256xf32> to vector<2x256xf32>
    %66 = arith.mulf %64, %65 : vector<2x256xf32>
    %c16 = arith.constant 16 : index
    %c0_37 = arith.constant 0 : index
    %67 = vector.load %arg10[%c16, %c0_37] : memref<36x256xf32, #tpu.memory_space<vmem>>, vector<2x256xf32>
    tpu.vector_store %arg10[%c16, %c0_37], %66 {strides = array<i32>} : memref<36x256xf32, #tpu.memory_space<vmem>>, vector<2x256xf32>,
    %c0_38 = arith.constant 0 : index
    %c0_39 = arith.constant 0 : index
    %68 = vector.load %arg2[%c0_38, %c0_39] : memref<4x18xf32, #tpu.memory_space<vmem>>, vector<4x18xf32>
    %c0_40 = arith.constant 0 : index
    %c0_41 = arith.constant 0 : index
    %69 = vector.load %arg10[%c0_40, %c0_41] : memref<36x256xf32, #tpu.memory_space<vmem>>, vector<18x256xf32>
    %cst_42 = arith.constant dense<0.000000e+00> : vector<4x256xf32>
    %70 = tpu.matmul %68, %69, %cst_42 {dimension_numbers = #tpu.dot_dimension_numbers<[1], [0], [0], [1], [0, 0, 1, 1], [], []>} : vector<4x18xf32>, vector<18x256xf32>, vector<4x256xf32> -> vector<4x256xf32>
    %71 = vector.broadcast %33 : vector<4x1xf32> to vector<4x256xf32>
    %72 = arith.addf %70, %71 : vector<4x256xf32>
    %73 = vector.extract_strided_slice %72 {offsets = [0, 0], sizes = [2, 256], strides = [1, 1]} : vector<4x256xf32> to vector<2x256xf32>
    %74 = vector.extract_strided_slice %72 {offsets = [2, 0], sizes = [2, 256], strides = [1, 1]} : vector<4x256xf32> to vector<2x256xf32>
    %75 = vector.extract_strided_slice %73 {offsets = [0, 0], sizes = [1, 256], strides = [1, 1]} : vector<2x256xf32> to vector<1x256xf32>
    %cst_43 = arith.constant dense<0.000000e+00> : vector<1xf32>
    %76 = vector.multi_reduction <add>, %75, %cst_43 [1] : vector<1x256xf32> to vector<1xf32>
    %77 = vector.shape_cast %76 : vector<1xf32> to vector<1x1xf32>
    %cst_44 = arith.constant 2.560000e+02 : f32
    %78 = vector.broadcast %cst_44 : f32 to vector<1x1xf32>
    %79 = arith.divf %77, %78 : vector<1x1xf32>
    %80 = vector.broadcast %79 : vector<1x1xf32> to vector<1x256xf32>
    %81 = arith.subf %75, %80 : vector<1x256xf32>
    %82 = arith.mulf %81, %81 : vector<1x256xf32>
    %cst_45 = arith.constant dense<0.000000e+00> : vector<1xf32>
    %83 = vector.multi_reduction <add>, %82, %cst_45 [1] : vector<1x256xf32> to vector<1xf32>
    %84 = vector.shape_cast %83 : vector<1xf32> to vector<1x1xf32>
    %cst_46 = arith.constant 2.560000e+02 : f32
    %85 = vector.broadcast %cst_46 : f32 to vector<1x1xf32>
    %86 = arith.divf %84, %85 : vector<1x1xf32>
    %87 = vector.broadcast %79 : vector<1x1xf32> to vector<1x256xf32>
    %88 = arith.subf %75, %87 : vector<1x256xf32>
    %cst_47 = arith.constant 9.99999974E-6 : f32
    %89 = vector.broadcast %cst_47 : f32 to vector<1x1xf32>
    %90 = arith.addf %86, %89 : vector<1x1xf32>
    %91 = math.rsqrt %90 : vector<1x1xf32>
    %92 = vector.broadcast %91 : vector<1x1xf32> to vector<1x256xf32>
    %93 = arith.mulf %88, %92 : vector<1x256xf32>
    %94 = vector.broadcast %35 : vector<1x1xf32> to vector<1x256xf32>
    %95 = arith.mulf %93, %94 : vector<1x256xf32>
    %96 = vector.broadcast %36 : vector<1x1xf32> to vector<1x256xf32>
    %97 = arith.addf %95, %96 : vector<1x256xf32>
    %98 = vector.extract_strided_slice %73 {offsets = [1, 0], sizes = [1, 256], strides = [1, 1]} : vector<2x256xf32> to vector<1x256xf32>
    %99 = tpu.concatenate %97, %98 in 0 : vector<1x256xf32>, vector<1x256xf32> -> vector<2x256xf32>
    %cst_48 = arith.constant 0.000000e+00 : f32
    %100 = vector.broadcast %cst_48 : f32 to vector<2x256xf32>
    %101 = arith.cmpf oge, %99, %100 : vector<2x256xf32>
    %cst_49 = arith.constant 1.000000e-01 : f32
    %102 = vector.broadcast %cst_49 : f32 to vector<2x256xf32>
    %103 = arith.mulf %102, %99 : vector<2x256xf32>
    %104 = arith.select %101, %99, %103 : vector<2x256xi1>, vector<2x256xf32>
    %c0_50 = arith.constant 0 : index
    %c128_51 = arith.constant 128 : index
    %105 = vector.load %arg9[%c0_50, %c128_51] : memref<4x401xf32, #tpu.memory_space<vmem>>, vector<2x256xf32>
    tpu.vector_store %arg9[%c0_50, %c128_51], %104 {strides = array<i32>} : memref<4x401xf32, #tpu.memory_space<vmem>>, vector<2x256xf32>,
    %c0_52 = arith.constant 0 : index
    %c111_53 = arith.constant 111 : index
    %106 = vector.load %arg9[%c0_52, %c111_53] : memref<4x401xf32, #tpu.memory_space<vmem>>, vector<2x256xf32>
    %107 = vector.broadcast %28 : vector<1x256xf32> to vector<2x256xf32>
    %108 = arith.mulf %106, %107 : vector<2x256xf32>
    %c0_54 = arith.constant 0 : index
    %c0_55 = arith.constant 0 : index
    %109 = vector.load %arg10[%c0_54, %c0_55] : memref<36x256xf32, #tpu.memory_space<vmem>>, vector<2x256xf32>
    tpu.vector_store %arg10[%c0_54, %c0_55], %108 {strides = array<i32>} : memref<36x256xf32, #tpu.memory_space<vmem>>, vector<2x256xf32>,
    %c0_56 = arith.constant 0 : index
    %c112_57 = arith.constant 112 : index
    %110 = vector.load %arg9[%c0_56, %c112_57] : memref<4x401xf32, #tpu.memory_space<vmem>>, vector<2x256xf32>
    %c2_58 = arith.constant 2 : index
    %c0_59 = arith.constant 0 : index
    %111 = vector.load %arg10[%c2_58, %c0_59] : memref<36x256xf32, #tpu.memory_space<vmem>>, vector<2x256xf32>
    tpu.vector_store %arg10[%c2_58, %c0_59], %110 {strides = array<i32>} : memref<36x256xf32, #tpu.memory_space<vmem>>, vector<2x256xf32>,
    %c0_60 = arith.constant 0 : index
    %c113_61 = arith.constant 113 : index
    %112 = vector.load %arg9[%c0_60, %c113_61] : memref<4x401xf32, #tpu.memory_space<vmem>>, vector<2x256xf32>
    %113 = vector.broadcast %32 : vector<1x256xf32> to vector<2x256xf32>
    %114 = arith.mulf %112, %113 : vector<2x256xf32>
    %c4_62 = arith.constant 4 : index
    %c0_63 = arith.constant 0 : index
    %115 = vector.load %arg10[%c4_62, %c0_63] : memref<36x256xf32, #tpu.memory_space<vmem>>, vector<2x256xf32>
    tpu.vector_store %arg10[%c4_62, %c0_63], %114 {strides = array<i32>} : memref<36x256xf32, #tpu.memory_space<vmem>>, vector<2x256xf32>,
    %c0_64 = arith.constant 0 : index
    %c127_65 = arith.constant 127 : index
    %116 = vector.load %arg9[%c0_64, %c127_65] : memref<4x401xf32, #tpu.memory_space<vmem>>, vector<2x256xf32>
    %117 = vector.broadcast %28 : vector<1x256xf32> to vector<2x256xf32>
    %118 = arith.mulf %116, %117 : vector<2x256xf32>
    %c6_66 = arith.constant 6 : index
    %c0_67 = arith.constant 0 : index
    %119 = vector.load %arg10[%c6_66, %c0_67] : memref<36x256xf32, #tpu.memory_space<vmem>>, vector<2x256xf32>
    tpu.vector_store %arg10[%c6_66, %c0_67], %118 {strides = array<i32>} : memref<36x256xf32, #tpu.memory_space<vmem>>, vector<2x256xf32>,
    %c0_68 = arith.constant 0 : index
    %c128_69 = arith.constant 128 : index
    %120 = vector.load %arg9[%c0_68, %c128_69] : memref<4x401xf32, #tpu.memory_space<vmem>>, vector<2x256xf32>
    %c8_70 = arith.constant 8 : index
    %c0_71 = arith.constant 0 : index
    %121 = vector.load %arg10[%c8_70, %c0_71] : memref<36x256xf32, #tpu.memory_space<vmem>>, vector<2x256xf32>
    tpu.vector_store %arg10[%c8_70, %c0_71], %120 {strides = array<i32>} : memref<36x256xf32, #tpu.memory_space<vmem>>, vector<2x256xf32>,
    %c0_72 = arith.constant 0 : index
    %c129_73 = arith.constant 129 : index
    %122 = vector.load %arg9[%c0_72, %c129_73] : memref<4x401xf32, #tpu.memory_space<vmem>>, vector<2x256xf32>
    %123 = vector.broadcast %32 : vector<1x256xf32> to vector<2x256xf32>
    %124 = arith.mulf %122, %123 : vector<2x256xf32>
    %c10_74 = arith.constant 10 : index
    %c0_75 = arith.constant 0 : index
    %125 = vector.load %arg10[%c10_74, %c0_75] : memref<36x256xf32, #tpu.memory_space<vmem>>, vector<2x256xf32>
    tpu.vector_store %arg10[%c10_74, %c0_75], %124 {strides = array<i32>} : memref<36x256xf32, #tpu.memory_space<vmem>>, vector<2x256xf32>,
    %c0_76 = arith.constant 0 : index
    %c143_77 = arith.constant 143 : index
    %126 = vector.load %arg9[%c0_76, %c143_77] : memref<4x401xf32, #tpu.memory_space<vmem>>, vector<2x256xf32>
    %127 = vector.broadcast %28 : vector<1x256xf32> to vector<2x256xf32>
    %128 = arith.mulf %126, %127 : vector<2x256xf32>
    %c12_78 = arith.constant 12 : index
    %c0_79 = arith.constant 0 : index
    %129 = vector.load %arg10[%c12_78, %c0_79] : memref<36x256xf32, #tpu.memory_space<vmem>>, vector<2x256xf32>
    tpu.vector_store %arg10[%c12_78, %c0_79], %128 {strides = array<i32>} : memref<36x256xf32, #tpu.memory_space<vmem>>, vector<2x256xf32>,
    %c0_80 = arith.constant 0 : index
    %c144_81 = arith.constant 144 : index
    %130 = vector.load %arg9[%c0_80, %c144_81] : memref<4x401xf32, #tpu.memory_space<vmem>>, vector<2x256xf32>
    %c14_82 = arith.constant 14 : index
    %c0_83 = arith.constant 0 : index
    %131 = vector.load %arg10[%c14_82, %c0_83] : memref<36x256xf32, #tpu.memory_space<vmem>>, vector<2x256xf32>
    tpu.vector_store %arg10[%c14_82, %c0_83], %130 {strides = array<i32>} : memref<36x256xf32, #tpu.memory_space<vmem>>, vector<2x256xf32>,
    %c0_84 = arith.constant 0 : index
    %c145_85 = arith.constant 145 : index
    %132 = vector.load %arg9[%c0_84, %c145_85] : memref<4x401xf32, #tpu.memory_space<vmem>>, vector<2x256xf32>
    %133 = vector.broadcast %32 : vector<1x256xf32> to vector<2x256xf32>
    %134 = arith.mulf %132, %133 : vector<2x256xf32>
    %c16_86 = arith.constant 16 : index
    %c0_87 = arith.constant 0 : index
    %135 = vector.load %arg10[%c16_86, %c0_87] : memref<36x256xf32, #tpu.memory_space<vmem>>, vector<2x256xf32>
    tpu.vector_store %arg10[%c16_86, %c0_87], %134 {strides = array<i32>} : memref<36x256xf32, #tpu.memory_space<vmem>>, vector<2x256xf32>,
    %c0_88 = arith.constant 0 : index
    %c0_89 = arith.constant 0 : index
    %136 = vector.load %arg3[%c0_88, %c0_89] : memref<2x18xf32, #tpu.memory_space<vmem>>, vector<2x18xf32>
    %c0_90 = arith.constant 0 : index
    %c0_91 = arith.constant 0 : index
    %137 = vector.load %arg10[%c0_90, %c0_91] : memref<36x256xf32, #tpu.memory_space<vmem>>, vector<18x256xf32>
    %cst_92 = arith.constant dense<0.000000e+00> : vector<2x256xf32>
    %138 = tpu.matmul %136, %137, %cst_92 {dimension_numbers = #tpu.dot_dimension_numbers<[1], [0], [0], [1], [0, 0, 1, 1], [], []>} : vector<2x18xf32>, vector<18x256xf32>, vector<2x256xf32> -> vector<2x256xf32>
    %139 = vector.broadcast %34 : vector<2x1xf32> to vector<2x256xf32>
    %140 = arith.addf %138, %139 : vector<2x256xf32>
    %cst_93 = arith.constant 0.000000e+00 : f32
    %141 = vector.broadcast %cst_93 : f32 to vector<2x256xf32>
    %142 = arith.cmpf oge, %140, %141 : vector<2x256xf32>
    %cst_94 = arith.constant 1.000000e-01 : f32
    %143 = vector.broadcast %cst_94 : f32 to vector<2x256xf32>
    %144 = arith.mulf %143, %140 : vector<2x256xf32>
    %145 = arith.select %142, %140, %144 : vector<2x256xi1>, vector<2x256xf32>
    %146 = arith.addf %145, %74 : vector<2x256xf32>
    %147 = arith.addf %6, %146 : vector<2x256xf32>
    %c0_95 = arith.constant 0 : index
    %c0_96 = arith.constant 0 : index
    %148 = vector.load %arg7[%c0_95, %c0_96] : memref<16x1xf32, #tpu.memory_space<vmem>>, vector<8x1xf32>
    %c8_97 = arith.constant 8 : index
    %c0_98 = arith.constant 0 : index
    %149 = vector.load %arg7[%c8_97, %c0_98] : memref<16x1xf32, #tpu.memory_space<vmem>>, vector<4x1xf32>
    %c12_99 = arith.constant 12 : index
    %c0_100 = arith.constant 0 : index
    %150 = vector.load %arg7[%c12_99, %c0_100] : memref<16x1xf32, #tpu.memory_space<vmem>>, vector<2x1xf32>
    %c14_101 = arith.constant 14 : index
    %c0_102 = arith.constant 0 : index
    %151 = vector.load %arg7[%c14_101, %c0_102] : memref<16x1xf32, #tpu.memory_space<vmem>>, vector<2x1xf32>
    %c0_103 = arith.constant 0 : index
    %c128_104 = arith.constant 128 : index
    %152 = vector.load %arg9[%c0_103, %c128_104] : memref<4x401xf32, #tpu.memory_space<vmem>>, vector<2x256xf32>
    tpu.vector_store %arg9[%c0_103, %c128_104], %147 {strides = array<i32>} : memref<4x401xf32, #tpu.memory_space<vmem>>, vector<2x256xf32>,
    %c0_105 = arith.constant 0 : index
    %c111_106 = arith.constant 111 : index
    %153 = vector.load %arg9[%c0_105, %c111_106] : memref<4x401xf32, #tpu.memory_space<vmem>>, vector<2x256xf32>
    %154 = vector.broadcast %28 : vector<1x256xf32> to vector<2x256xf32>
    %155 = arith.mulf %153, %154 : vector<2x256xf32>
    %c0_107 = arith.constant 0 : index
    %c0_108 = arith.constant 0 : index
    %156 = vector.load %arg10[%c0_107, %c0_108] : memref<36x256xf32, #tpu.memory_space<vmem>>, vector<2x256xf32>
    tpu.vector_store %arg10[%c0_107, %c0_108], %155 {strides = array<i32>} : memref<36x256xf32, #tpu.memory_space<vmem>>, vector<2x256xf32>,
    %c0_109 = arith.constant 0 : index
    %c112_110 = arith.constant 112 : index
    %157 = vector.load %arg9[%c0_109, %c112_110] : memref<4x401xf32, #tpu.memory_space<vmem>>, vector<2x256xf32>
    %c2_111 = arith.constant 2 : index
    %c0_112 = arith.constant 0 : index
    %158 = vector.load %arg10[%c2_111, %c0_112] : memref<36x256xf32, #tpu.memory_space<vmem>>, vector<2x256xf32>
    tpu.vector_store %arg10[%c2_111, %c0_112], %157 {strides = array<i32>} : memref<36x256xf32, #tpu.memory_space<vmem>>, vector<2x256xf32>,
    %c0_113 = arith.constant 0 : index
    %c113_114 = arith.constant 113 : index
    %159 = vector.load %arg9[%c0_113, %c113_114] : memref<4x401xf32, #tpu.memory_space<vmem>>, vector<2x256xf32>
    %160 = vector.broadcast %32 : vector<1x256xf32> to vector<2x256xf32>
    %161 = arith.mulf %159, %160 : vector<2x256xf32>
    %c4_115 = arith.constant 4 : index
    %c0_116 = arith.constant 0 : index
    %162 = vector.load %arg10[%c4_115, %c0_116] : memref<36x256xf32, #tpu.memory_space<vmem>>, vector<2x256xf32>
    tpu.vector_store %arg10[%c4_115, %c0_116], %161 {strides = array<i32>} : memref<36x256xf32, #tpu.memory_space<vmem>>, vector<2x256xf32>,
    %c0_117 = arith.constant 0 : index
    %c127_118 = arith.constant 127 : index
    %163 = vector.load %arg9[%c0_117, %c127_118] : memref<4x401xf32, #tpu.memory_space<vmem>>, vector<2x256xf32>
    %164 = vector.broadcast %28 : vector<1x256xf32> to vector<2x256xf32>
    %165 = arith.mulf %163, %164 : vector<2x256xf32>
    %c6_119 = arith.constant 6 : index
    %c0_120 = arith.constant 0 : index
    %166 = vector.load %arg10[%c6_119, %c0_120] : memref<36x256xf32, #tpu.memory_space<vmem>>, vector<2x256xf32>
    tpu.vector_store %arg10[%c6_119, %c0_120], %165 {strides = array<i32>} : memref<36x256xf32, #tpu.memory_space<vmem>>, vector<2x256xf32>,
    %c0_121 = arith.constant 0 : index
    %c128_122 = arith.constant 128 : index
    %167 = vector.load %arg9[%c0_121, %c128_122] : memref<4x401xf32, #tpu.memory_space<vmem>>, vector<2x256xf32>
    %c8_123 = arith.constant 8 : index
    %c0_124 = arith.constant 0 : index
    %168 = vector.load %arg10[%c8_123, %c0_124] : memref<36x256xf32, #tpu.memory_space<vmem>>, vector<2x256xf32>
    tpu.vector_store %arg10[%c8_123, %c0_124], %167 {strides = array<i32>} : memref<36x256xf32, #tpu.memory_space<vmem>>, vector<2x256xf32>,
    %c0_125 = arith.constant 0 : index
    %c129_126 = arith.constant 129 : index
    %169 = vector.load %arg9[%c0_125, %c129_126] : memref<4x401xf32, #tpu.memory_space<vmem>>, vector<2x256xf32>
    %170 = vector.broadcast %32 : vector<1x256xf32> to vector<2x256xf32>
    %171 = arith.mulf %169, %170 : vector<2x256xf32>
    %c10_127 = arith.constant 10 : index
    %c0_128 = arith.constant 0 : index
    %172 = vector.load %arg10[%c10_127, %c0_128] : memref<36x256xf32, #tpu.memory_space<vmem>>, vector<2x256xf32>
    tpu.vector_store %arg10[%c10_127, %c0_128], %171 {strides = array<i32>} : memref<36x256xf32, #tpu.memory_space<vmem>>, vector<2x256xf32>,
    %c0_129 = arith.constant 0 : index
    %c143_130 = arith.constant 143 : index
    %173 = vector.load %arg9[%c0_129, %c143_130] : memref<4x401xf32, #tpu.memory_space<vmem>>, vector<2x256xf32>
    %174 = vector.broadcast %28 : vector<1x256xf32> to vector<2x256xf32>
    %175 = arith.mulf %173, %174 : vector<2x256xf32>
    %c12_131 = arith.constant 12 : index
    %c0_132 = arith.constant 0 : index
    %176 = vector.load %arg10[%c12_131, %c0_132] : memref<36x256xf32, #tpu.memory_space<vmem>>, vector<2x256xf32>
    tpu.vector_store %arg10[%c12_131, %c0_132], %175 {strides = array<i32>} : memref<36x256xf32, #tpu.memory_space<vmem>>, vector<2x256xf32>,
    %c0_133 = arith.constant 0 : index
    %c144_134 = arith.constant 144 : index
    %177 = vector.load %arg9[%c0_133, %c144_134] : memref<4x401xf32, #tpu.memory_space<vmem>>, vector<2x256xf32>
    %c14_135 = arith.constant 14 : index
    %c0_136 = arith.constant 0 : index
    %178 = vector.load %arg10[%c14_135, %c0_136] : memref<36x256xf32, #tpu.memory_space<vmem>>, vector<2x256xf32>
    tpu.vector_store %arg10[%c14_135, %c0_136], %177 {strides = array<i32>} : memref<36x256xf32, #tpu.memory_space<vmem>>, vector<2x256xf32>,
    %c0_137 = arith.constant 0 : index
    %c145_138 = arith.constant 145 : index
    %179 = vector.load %arg9[%c0_137, %c145_138] : memref<4x401xf32, #tpu.memory_space<vmem>>, vector<2x256xf32>
    %180 = vector.broadcast %32 : vector<1x256xf32> to vector<2x256xf32>
    %181 = arith.mulf %179, %180 : vector<2x256xf32>
    %c16_139 = arith.constant 16 : index
    %c0_140 = arith.constant 0 : index
    %182 = vector.load %arg10[%c16_139, %c0_140] : memref<36x256xf32, #tpu.memory_space<vmem>>, vector<2x256xf32>
    tpu.vector_store %arg10[%c16_139, %c0_140], %181 {strides = array<i32>} : memref<36x256xf32, #tpu.memory_space<vmem>>, vector<2x256xf32>,
    %c0_141 = arith.constant 0 : index
    %c0_142 = arith.constant 0 : index
    %183 = vector.load %arg5[%c0_141, %c0_142] : memref<8x18xf32, #tpu.memory_space<vmem>>, vector<8x18xf32>
    %c0_143 = arith.constant 0 : index
    %c0_144 = arith.constant 0 : index
    %184 = vector.load %arg10[%c0_143, %c0_144] : memref<36x256xf32, #tpu.memory_space<vmem>>, vector<18x256xf32>
    %cst_145 = arith.constant dense<0.000000e+00> : vector<8x256xf32>
    %185 = tpu.matmul %183, %184, %cst_145 {dimension_numbers = #tpu.dot_dimension_numbers<[1], [0], [0], [1], [0, 0, 1, 1], [], []>} : vector<8x18xf32>, vector<18x256xf32>, vector<8x256xf32> -> vector<8x256xf32>
    %186 = vector.broadcast %148 : vector<8x1xf32> to vector<8x256xf32>
    %187 = arith.addf %185, %186 : vector<8x256xf32>
    %188 = vector.extract_strided_slice %187 {offsets = [0, 0], sizes = [4, 256], strides = [1, 1]} : vector<8x256xf32> to vector<4x256xf32>
    %189 = vector.extract_strided_slice %187 {offsets = [4, 0], sizes = [4, 256], strides = [1, 1]} : vector<8x256xf32> to vector<4x256xf32>
    %190 = vector.extract_strided_slice %188 {offsets = [0, 0], sizes = [2, 256], strides = [1, 1]} : vector<4x256xf32> to vector<2x256xf32>
    %cst_146 = arith.constant dense<0.000000e+00> : vector<2xf32>
    %191 = vector.multi_reduction <add>, %190, %cst_146 [1] : vector<2x256xf32> to vector<2xf32>
    %192 = vector.shape_cast %191 : vector<2xf32> to vector<2x1xf32>
    %cst_147 = arith.constant 2.560000e+02 : f32
    %193 = vector.broadcast %cst_147 : f32 to vector<2x1xf32>
    %194 = arith.divf %192, %193 : vector<2x1xf32>
    %195 = vector.broadcast %194 : vector<2x1xf32> to vector<2x256xf32>
    %196 = arith.subf %190, %195 : vector<2x256xf32>
    %197 = arith.mulf %196, %196 : vector<2x256xf32>
    %cst_148 = arith.constant dense<0.000000e+00> : vector<2xf32>
    %198 = vector.multi_reduction <add>, %197, %cst_148 [1] : vector<2x256xf32> to vector<2xf32>
    %199 = vector.shape_cast %198 : vector<2xf32> to vector<2x1xf32>
    %cst_149 = arith.constant 2.560000e+02 : f32
    %200 = vector.broadcast %cst_149 : f32 to vector<2x1xf32>
    %201 = arith.divf %199, %200 : vector<2x1xf32>
    %202 = vector.broadcast %194 : vector<2x1xf32> to vector<2x256xf32>
    %203 = arith.subf %190, %202 : vector<2x256xf32>
    %cst_150 = arith.constant 9.99999974E-6 : f32
    %204 = vector.broadcast %cst_150 : f32 to vector<2x1xf32>
    %205 = arith.addf %201, %204 : vector<2x1xf32>
    %206 = math.rsqrt %205 : vector<2x1xf32>
    %207 = vector.broadcast %206 : vector<2x1xf32> to vector<2x256xf32>
    %208 = arith.mulf %203, %207 : vector<2x256xf32>
    %209 = vector.broadcast %150 : vector<2x1xf32> to vector<2x256xf32>
    %210 = arith.mulf %208, %209 : vector<2x256xf32>
    %211 = vector.broadcast %151 : vector<2x1xf32> to vector<2x256xf32>
    %212 = arith.addf %210, %211 : vector<2x256xf32>
    %213 = vector.extract_strided_slice %188 {offsets = [2, 0], sizes = [2, 256], strides = [1, 1]} : vector<4x256xf32> to vector<2x256xf32>
    %214 = tpu.concatenate %212, %213 in 0 : vector<2x256xf32>, vector<2x256xf32> -> vector<4x256xf32>
    %cst_151 = arith.constant 0.000000e+00 : f32
    %215 = vector.broadcast %cst_151 : f32 to vector<4x256xf32>
    %216 = arith.cmpf oge, %214, %215 : vector<4x256xf32>
    %cst_152 = arith.constant 1.000000e-01 : f32
    %217 = vector.broadcast %cst_152 : f32 to vector<4x256xf32>
    %218 = arith.mulf %217, %214 : vector<4x256xf32>
    %219 = arith.select %216, %214, %218 : vector<4x256xi1>, vector<4x256xf32>
    %c0_153 = arith.constant 0 : index
    %c128_154 = arith.constant 128 : index
    %220 = vector.load %arg9[%c0_153, %c128_154] : memref<4x401xf32, #tpu.memory_space<vmem>>, vector<4x256xf32>
    tpu.vector_store %arg9[%c0_153, %c128_154], %219 {strides = array<i32>} : memref<4x401xf32, #tpu.memory_space<vmem>>, vector<4x256xf32>,
    %c0_155 = arith.constant 0 : index
    %c111_156 = arith.constant 111 : index
    %221 = vector.load %arg9[%c0_155, %c111_156] : memref<4x401xf32, #tpu.memory_space<vmem>>, vector<4x256xf32>
    %222 = vector.broadcast %28 : vector<1x256xf32> to vector<4x256xf32>
    %223 = arith.mulf %221, %222 : vector<4x256xf32>
    %c0_157 = arith.constant 0 : index
    %c0_158 = arith.constant 0 : index
    %224 = vector.load %arg10[%c0_157, %c0_158] : memref<36x256xf32, #tpu.memory_space<vmem>>, vector<4x256xf32>
    tpu.vector_store %arg10[%c0_157, %c0_158], %223 {strides = array<i32>} : memref<36x256xf32, #tpu.memory_space<vmem>>, vector<4x256xf32>,
    %c0_159 = arith.constant 0 : index
    %c112_160 = arith.constant 112 : index
    %225 = vector.load %arg9[%c0_159, %c112_160] : memref<4x401xf32, #tpu.memory_space<vmem>>, vector<4x256xf32>
    %c4_161 = arith.constant 4 : index
    %c0_162 = arith.constant 0 : index
    %226 = vector.load %arg10[%c4_161, %c0_162] : memref<36x256xf32, #tpu.memory_space<vmem>>, vector<4x256xf32>
    tpu.vector_store %arg10[%c4_161, %c0_162], %225 {strides = array<i32>} : memref<36x256xf32, #tpu.memory_space<vmem>>, vector<4x256xf32>,
    %c0_163 = arith.constant 0 : index
    %c113_164 = arith.constant 113 : index
    %227 = vector.load %arg9[%c0_163, %c113_164] : memref<4x401xf32, #tpu.memory_space<vmem>>, vector<4x256xf32>
    %228 = vector.broadcast %32 : vector<1x256xf32> to vector<4x256xf32>
    %229 = arith.mulf %227, %228 : vector<4x256xf32>
    %c8_165 = arith.constant 8 : index
    %c0_166 = arith.constant 0 : index
    %230 = vector.load %arg10[%c8_165, %c0_166] : memref<36x256xf32, #tpu.memory_space<vmem>>, vector<4x256xf32>
    tpu.vector_store %arg10[%c8_165, %c0_166], %229 {strides = array<i32>} : memref<36x256xf32, #tpu.memory_space<vmem>>, vector<4x256xf32>,
    %c0_167 = arith.constant 0 : index
    %c127_168 = arith.constant 127 : index
    %231 = vector.load %arg9[%c0_167, %c127_168] : memref<4x401xf32, #tpu.memory_space<vmem>>, vector<4x256xf32>
    %232 = vector.broadcast %28 : vector<1x256xf32> to vector<4x256xf32>
    %233 = arith.mulf %231, %232 : vector<4x256xf32>
    %c12_169 = arith.constant 12 : index
    %c0_170 = arith.constant 0 : index
    %234 = vector.load %arg10[%c12_169, %c0_170] : memref<36x256xf32, #tpu.memory_space<vmem>>, vector<4x256xf32>
    tpu.vector_store %arg10[%c12_169, %c0_170], %233 {strides = array<i32>} : memref<36x256xf32, #tpu.memory_space<vmem>>, vector<4x256xf32>,
    %c0_171 = arith.constant 0 : index
    %c128_172 = arith.constant 128 : index
    %235 = vector.load %arg9[%c0_171, %c128_172] : memref<4x401xf32, #tpu.memory_space<vmem>>, vector<4x256xf32>
    %c16_173 = arith.constant 16 : index
    %c0_174 = arith.constant 0 : index
    %236 = vector.load %arg10[%c16_173, %c0_174] : memref<36x256xf32, #tpu.memory_space<vmem>>, vector<4x256xf32>
    tpu.vector_store %arg10[%c16_173, %c0_174], %235 {strides = array<i32>} : memref<36x256xf32, #tpu.memory_space<vmem>>, vector<4x256xf32>,
    %c0_175 = arith.constant 0 : index
    %c129_176 = arith.constant 129 : index
    %237 = vector.load %arg9[%c0_175, %c129_176] : memref<4x401xf32, #tpu.memory_space<vmem>>, vector<4x256xf32>
    %238 = vector.broadcast %32 : vector<1x256xf32> to vector<4x256xf32>
    %239 = arith.mulf %237, %238 : vector<4x256xf32>
    %c20 = arith.constant 20 : index
    %c0_177 = arith.constant 0 : index
    %240 = vector.load %arg10[%c20, %c0_177] : memref<36x256xf32, #tpu.memory_space<vmem>>, vector<4x256xf32>
    tpu.vector_store %arg10[%c20, %c0_177], %239 {strides = array<i32>} : memref<36x256xf32, #tpu.memory_space<vmem>>, vector<4x256xf32>,
    %c0_178 = arith.constant 0 : index
    %c143_179 = arith.constant 143 : index
    %241 = vector.load %arg9[%c0_178, %c143_179] : memref<4x401xf32, #tpu.memory_space<vmem>>, vector<4x256xf32>
    %242 = vector.broadcast %28 : vector<1x256xf32> to vector<4x256xf32>
    %243 = arith.mulf %241, %242 : vector<4x256xf32>
    %c24 = arith.constant 24 : index
    %c0_180 = arith.constant 0 : index
    %244 = vector.load %arg10[%c24, %c0_180] : memref<36x256xf32, #tpu.memory_space<vmem>>, vector<4x256xf32>
    tpu.vector_store %arg10[%c24, %c0_180], %243 {strides = array<i32>} : memref<36x256xf32, #tpu.memory_space<vmem>>, vector<4x256xf32>,
    %c0_181 = arith.constant 0 : index
    %c144_182 = arith.constant 144 : index
    %245 = vector.load %arg9[%c0_181, %c144_182] : memref<4x401xf32, #tpu.memory_space<vmem>>, vector<4x256xf32>
    %c28 = arith.constant 28 : index
    %c0_183 = arith.constant 0 : index
    %246 = vector.load %arg10[%c28, %c0_183] : memref<36x256xf32, #tpu.memory_space<vmem>>, vector<4x256xf32>
    tpu.vector_store %arg10[%c28, %c0_183], %245 {strides = array<i32>} : memref<36x256xf32, #tpu.memory_space<vmem>>, vector<4x256xf32>,
    %c0_184 = arith.constant 0 : index
    %c145_185 = arith.constant 145 : index
    %247 = vector.load %arg9[%c0_184, %c145_185] : memref<4x401xf32, #tpu.memory_space<vmem>>, vector<4x256xf32>
    %248 = vector.broadcast %32 : vector<1x256xf32> to vector<4x256xf32>
    %249 = arith.mulf %247, %248 : vector<4x256xf32>
    %c32 = arith.constant 32 : index
    %c0_186 = arith.constant 0 : index
    %250 = vector.load %arg10[%c32, %c0_186] : memref<36x256xf32, #tpu.memory_space<vmem>>, vector<4x256xf32>
    tpu.vector_store %arg10[%c32, %c0_186], %249 {strides = array<i32>} : memref<36x256xf32, #tpu.memory_space<vmem>>, vector<4x256xf32>,
    %c0_187 = arith.constant 0 : index
    %c0_188 = arith.constant 0 : index
    %251 = vector.load %arg6[%c0_187, %c0_188] : memref<4x36xf32, #tpu.memory_space<vmem>>, vector<4x36xf32>
    %c0_189 = arith.constant 0 : index
    %c0_190 = arith.constant 0 : index
    %252 = vector.load %arg10[%c0_189, %c0_190] : memref<36x256xf32, #tpu.memory_space<vmem>>, vector<36x256xf32>
    %cst_191 = arith.constant dense<0.000000e+00> : vector<4x256xf32>
    %253 = tpu.matmul %251, %252, %cst_191 {dimension_numbers = #tpu.dot_dimension_numbers<[1], [0], [0], [1], [0, 0, 1, 1], [], []>} : vector<4x36xf32>, vector<36x256xf32>, vector<4x256xf32> -> vector<4x256xf32>
    %254 = vector.broadcast %149 : vector<4x1xf32> to vector<4x256xf32>
    %255 = arith.addf %253, %254 : vector<4x256xf32>
    %cst_192 = arith.constant 0.000000e+00 : f32
    %256 = vector.broadcast %cst_192 : f32 to vector<4x256xf32>
    %257 = arith.cmpf oge, %255, %256 : vector<4x256xf32>
    %cst_193 = arith.constant 1.000000e-01 : f32
    %258 = vector.broadcast %cst_193 : f32 to vector<4x256xf32>
    %259 = arith.mulf %258, %255 : vector<4x256xf32>
    %260 = arith.select %257, %255, %259 : vector<4x256xi1>, vector<4x256xf32>
    %261 = arith.addf %260, %189 : vector<4x256xf32>
    %262 = vector.extract_strided_slice %261 {offsets = [0, 0], sizes = [2, 256], strides = [1, 1]} : vector<4x256xf32> to vector<2x256xf32>
    %263 = vector.extract_strided_slice %261 {offsets = [2, 0], sizes = [2, 256], strides = [1, 1]} : vector<4x256xf32> to vector<2x256xf32>
    %264 = arith.negf %262 : vector<2x256xf32>
    %265 = math.exp %264 : vector<2x256xf32>
    %cst_194 = arith.constant 1.000000e+00 : f32
    %266 = vector.broadcast %cst_194 : f32 to vector<2x256xf32>
    %267 = arith.addf %266, %265 : vector<2x256xf32>
    %268 = arith.divf %266, %267 : vector<2x256xf32>
    %cst_195 = arith.constant 2.000000e+00 : f32
    %269 = vector.broadcast %cst_195 : f32 to vector<2x256xf32>
    %270 = arith.mulf %269, %268 : vector<2x256xf32>
    %cst_196 = arith.constant 1.000000e+00 : f32
    %271 = vector.broadcast %cst_196 : f32 to vector<2x256xf32>
    %272 = arith.subf %270, %271 : vector<2x256xf32>
    %cst_197 = arith.constant 8.000000e-01 : f32
    %273 = vector.broadcast %cst_197 : f32 to vector<2x256xf32>
    %274 = arith.mulf %273, %272 : vector<2x256xf32>
    %275 = math.exp %274 : vector<2x256xf32>
    %276 = arith.mulf %7, %275 : vector<2x256xf32>
    %277 = arith.addf %276, %263 : vector<2x256xf32>
    %278 = tpu.concatenate %147, %277 in 0 : vector<2x256xf32>, vector<2x256xf32> -> vector<4x256xf32>
    %279 = arith.addf %5, %278 : vector<4x256xf32>
    %c0_198 = arith.constant 0 : index
    %c0_199 = arith.constant 0 : index
    %c0_200 = arith.constant 0 : index
    %280 = vector.load %arg8[%c0_198, %c0_199, %c0_200] : memref<1x4x256xf32, #tpu.memory_space<vmem>>, vector<1x4x256xf32>
    %281 = vector.shape_cast %280 : vector<1x4x256xf32> to vector<4x256xf32>
    %282 = vector.shape_cast %279 : vector<4x256xf32> to vector<1x4x256xf32>
    tpu.vector_store %arg8[%c0_198, %c0_199, %c0_200], %282 {strides = array<i32>} : memref<1x4x256xf32, #tpu.memory_space<vmem>>, vector<1x4x256xf32>,
    return
  }
  func.func @transform_0(%arg0: i32) -> (i32, i32, i32) {
    %c0_i32 = arith.constant 0 : i32
    %c0_i32_0 = arith.constant 0 : i32
    %c0_i32_1 = arith.constant 0 : i32
    return %arg0, %c0_i32, %c0_i32_0 : i32, i32, i32
  }
  func.func @transform_1(%arg0: i32) -> (i32, i32) {
    %c0_i32 = arith.constant 0 : i32
    %c0_i32_0 = arith.constant 0 : i32
    %c0_i32_1 = arith.constant 0 : i32
    return %c0_i32, %c0_i32_0 : i32, i32
  }
  func.func @transform_2(%arg0: i32) -> (i32, i32) {
    %c0_i32 = arith.constant 0 : i32
    %c0_i32_0 = arith.constant 0 : i32
    %c0_i32_1 = arith.constant 0 : i32
    return %c0_i32, %c0_i32_0 : i32, i32
  }
  func.func @transform_3(%arg0: i32) -> (i32, i32) {
    %c0_i32 = arith.constant 0 : i32
    %c0_i32_0 = arith.constant 0 : i32
    %c0_i32_1 = arith.constant 0 : i32
    return %c0_i32, %c0_i32_0 : i32, i32
  }
  func.func @transform_4(%arg0: i32) -> (i32, i32) {
    %c0_i32 = arith.constant 0 : i32
    %c0_i32_0 = arith.constant 0 : i32
    %c0_i32_1 = arith.constant 0 : i32
    return %c0_i32, %c0_i32_0 : i32, i32
  }
  func.func @transform_5(%arg0: i32) -> (i32, i32) {
    %c0_i32 = arith.constant 0 : i32
    %c0_i32_0 = arith.constant 0 : i32
    %c0_i32_1 = arith.constant 0 : i32
    return %c0_i32, %c0_i32_0 : i32, i32
  }
  func.func @transform_6(%arg0: i32) -> (i32, i32) {
    %c0_i32 = arith.constant 0 : i32
    %c0_i32_0 = arith.constant 0 : i32
    %c0_i32_1 = arith.constant 0 : i32
    return %c0_i32, %c0_i32_0 : i32, i32
  }
  func.func @transform_7(%arg0: i32) -> (i32, i32, i32) {
    %c0_i32 = arith.constant 0 : i32
    %c0_i32_0 = arith.constant 0 : i32
    %c0_i32_1 = arith.constant 0 : i32
    return %arg0, %c0_i32, %c0_i32_0 : i32, i32, i32
  }
}

</mosaic_0001>

<llo_original>
// kernel: spa_block.1
$region0: #{spa_block.1}
  #allocation0 [shape = 'u32[]', space=smem, size = 0x4, offset = 0x4, fixed_abs, tag = 'smem constant byte address 0x4 - core index']
  #allocation1 [shape = 'u32[72,128]{1,0:T(1,128)}', space=vmem, size = 0x9000, scoped, tag = 'internal scratch']
  #allocation2 [shape = 'f32[4,401]{1,0:T(4,128)}', space=vmem, size = 0x2000, scoped, tag = 'scratch operand']
  #allocation3 [shape = 'f32[36,256]{1,0:T(8,128)}', space=vmem, size = 0xa000, scoped, tag = 'scratch operand']
  %s0 = inlined_call_operand.vmem [shape: f32[2,4,256], index: 0, kind: input, shape index: {}]
  %s1 = inlined_call_operand.vmem [shape: f32[4,18], index: 1, kind: input, shape index: {}]
  %s2 = inlined_call_operand.vmem [shape: f32[2,18], index: 2, kind: input, shape index: {}]
  %s3 = inlined_call_operand.vmem [shape: f32[8,1], index: 3, kind: input, shape index: {}]
  %s4 = inlined_call_operand.vmem [shape: f32[8,18], index: 4, kind: input, shape index: {}]
  %s5 = inlined_call_operand.vmem [shape: f32[4,36], index: 5, kind: input, shape index: {}]
  %s6 = inlined_call_operand.vmem [shape: f32[16,1], index: 6, kind: input, shape index: {}]
  %s7 = inlined_call_operand.vmem [shape: f32[2,4,256], index: 7, kind: output, shape index: {}]
  %s8 = sld [smem:[#allocation0]]
  $region61: #{spa_block.1} parent=0
    _
  %s10 = ssub.s32 1, %s8
  %s11 = scalar_select 0, %s10, %s8
  loop: start=0, step=1, limit=4
  $region2: #{spa_block.1} parent=0 // loop_pre_header
    _
  $region3: #{spa_block.1} parent=0 // loop_header
    %s13 = sphi 0, %s17
    %p14 = scmp.ge.s32.totalorder %s13, 4
    %s23 = sphi 0, %s25
    %s26 = sphi 0, %s23
    %s27 = sphi 0, %s26
    %s43 = sphi 0, %s27
    %s47 = sphi 0, %s47
    %s49 = sphi 0, %s47
    %s50 = sphi 0, %s49
    %s64 = sphi 0, %s50
    %s68 = sphi 0, %s68
    %s70 = sphi 0, %s68
    %s71 = sphi 0, %s70
    %s85 = sphi 0, %s71
    %s89 = sphi 0, %s89
    %s91 = sphi 0, %s89
    %s92 = sphi 0, %s91
    %s106 = sphi 0, %s92
    %s110 = sphi 0, %s110
    %s112 = sphi 0, %s110
    %s113 = sphi 0, %s112
    %s127 = sphi 0, %s113
    %s131 = sphi 0, %s131
    %s133 = sphi 0, %s131
    %s134 = sphi 0, %s133
    %s148 = sphi 0, %s134
    %s152 = sphi 0, %s152
    %s154 = sphi 0, %s152
    %s155 = sphi 0, %s154
    %s169 = sphi 0, %s155
    %s175 = sphi 0, %s177
    %s178 = sphi 0, %s175
    %s179 = sphi 0, %s178
    %s195 = sphi 0, %s179
  $region4: #{spa_block.1} parent=0 // loop_header_branch
    %16 = sbr.rel (%p14) target = $region8
  $region5: #{spa_block.1} parent=0 // loop_body
    %s18 = ssub.s32 %s13, 1
    %s19 = ssub.s32 %s13, 2
    %s20 = sadd.s32 %s13, 1
    %s21 = ssub.s32 %s13, %s20
    %p22 = scmp.eq.s32.totalorder %s21, 0
    %s24 = sadd.s32 %s23, 1
    %s25 = scalar_select %p22, %s23, %s24
    %p28 = pneg %p22
    %p29 = scmp.eq.s32.totalorder %s13, 1
    %p30 = por %p28, %p29
    %p31 = scmp.ne.s32.totalorder %s23, %s26
    %p32 = scmp.eq.s32.totalorder %s13, 0
    %p33 = por %p31, %p32
    %p34 = scmp.ne.s32.totalorder %s23, %s26
    %p35 = scmp.eq.s32.totalorder %s18, 1
    %p36 = por %p34, %p35
    %p37 = scmp.ne.s32.totalorder %s26, %s27
    %p38 = scmp.eq.s32.totalorder %s18, 0
    %p39 = por %p37, %p38
    %p40 = scmp.ne.s32.totalorder %s26, %s27
    %p41 = scmp.eq.s32.totalorder %s19, 1
    %p42 = por %p40, %p41
    %p44 = scmp.ne.s32.totalorder %s27, %s43
    %p45 = scmp.eq.s32.totalorder %s19, 0
    %p46 = por %p44, %p45
    %s48 = sadd.s32 %s47, 1
    %p51 = scmp.eq.s32.totalorder %s13, 1
    %p52 = scmp.ne.s32.totalorder %s47, %s49
    %p53 = scmp.eq.s32.totalorder %s13, 0
    %p54 = por %p52, %p53
    %p55 = scmp.ne.s32.totalorder %s47, %s49
    %p56 = scmp.eq.s32.totalorder %s18, 1
    %p57 = por %p55, %p56
    %p58 = scmp.ne.s32.totalorder %s49, %s50
    %p59 = scmp.eq.s32.totalorder %s18, 0
    %p60 = por %p58, %p59
    %p61 = scmp.ne.s32.totalorder %s49, %s50
    %p62 = scmp.eq.s32.totalorder %s19, 1
    %p63 = por %p61, %p62
    %p65 = scmp.ne.s32.totalorder %s50, %s64
    %p66 = scmp.eq.s32.totalorder %s19, 0
    %p67 = por %p65, %p66
    %s69 = sadd.s32 %s68, 1
    %p72 = scmp.eq.s32.totalorder %s13, 1
    %p73 = scmp.ne.s32.totalorder %s68, %s70
    %p74 = scmp.eq.s32.totalorder %s13, 0
    %p75 = por %p73, %p74
    %p76 = scmp.ne.s32.totalorder %s68, %s70
    %p77 = scmp.eq.s32.totalorder %s18, 1
    %p78 = por %p76, %p77
    %p79 = scmp.ne.s32.totalorder %s70, %s71
    %p80 = scmp.eq.s32.totalorder %s18, 0
    %p81 = por %p79, %p80
    %p82 = scmp.ne.s32.totalorder %s70, %s71
    %p83 = scmp.eq.s32.totalorder %s19, 1
    %p84 = por %p82, %p83
    %p86 = scmp.ne.s32.totalorder %s71, %s85
    %p87 = scmp.eq.s32.totalorder %s19, 0
    %p88 = por %p86, %p87
    %s90 = sadd.s32 %s89, 1
    %p93 = scmp.eq.s32.totalorder %s13, 1
    %p94 = scmp.ne.s32.totalorder %s89, %s91
    %p95 = scmp.eq.s32.totalorder %s13, 0
    %p96 = por %p94, %p95
    %p97 = scmp.ne.s32.totalorder %s89, %s91
    %p98 = scmp.eq.s32.totalorder %s18, 1
    %p99 = por %p97, %p98
    %p100 = scmp.ne.s32.totalorder %s91, %s92
    %p101 = scmp.eq.s32.totalorder %s18, 0
    %p102 = por %p100, %p101
    %p103 = scmp.ne.s32.totalorder %s91, %s92
    %p104 = scmp.eq.s32.totalorder %s19, 1
    %p105 = por %p103, %p104
    %p107 = scmp.ne.s32.totalorder %s92, %s106
    %p108 = scmp.eq.s32.totalorder %s19, 0
    %p109 = por %p107, %p108
    %s111 = sadd.s32 %s110, 1
    %p114 = scmp.eq.s32.totalorder %s13, 1
    %p115 = scmp.ne.s32.totalorder %s110, %s112
    %p116 = scmp.eq.s32.totalorder %s13, 0
    %p117 = por %p115, %p116
    %p118 = scmp.ne.s32.totalorder %s110, %s112
    %p119 = scmp.eq.s32.totalorder %s18, 1
    %p120 = por %p118, %p119
    %p121 = scmp.ne.s32.totalorder %s112, %s113
    %p122 = scmp.eq.s32.totalorder %s18, 0
    %p123 = por %p121, %p122
    %p124 = scmp.ne.s32.totalorder %s112, %s113
    %p125 = scmp.eq.s32.totalorder %s19, 1
    %p126 = por %p124, %p125
    %p128 = scmp.ne.s32.totalorder %s113, %s127
    %p129 = scmp.eq.s32.totalorder %s19, 0
    %p130 = por %p128, %p129
    %s132 = sadd.s32 %s131, 1
    %p135 = scmp.eq.s32.totalorder %s13, 1
    %p136 = scmp.ne.s32.totalorder %s131, %s133
    %p137 = scmp.eq.s32.totalorder %s13, 0
    %p138 = por %p136, %p137
    %p139 = scmp.ne.s32.totalorder %s131, %s133
    %p140 = scmp.eq.s32.totalorder %s18, 1
    %p141 = por %p139, %p140
    %p142 = scmp.ne.s32.totalorder %s133, %s134
    %p143 = scmp.eq.s32.totalorder %s18, 0
    %p144 = por %p142, %p143
    %p145 = scmp.ne.s32.totalorder %s133, %s134
    %p146 = scmp.eq.s32.totalorder %s19, 1
    %p147 = por %p145, %p146
    %p149 = scmp.ne.s32.totalorder %s134, %s148
    %p150 = scmp.eq.s32.totalorder %s19, 0
    %p151 = por %p149, %p150
    %s153 = sadd.s32 %s152, 1
    %p156 = scmp.eq.s32.totalorder %s13, 1
    %p157 = scmp.ne.s32.totalorder %s152, %s154
    %p158 = scmp.eq.s32.totalorder %s13, 0
    %p159 = por %p157, %p158
    %p160 = scmp.ne.s32.totalorder %s152, %s154
    %p161 = scmp.eq.s32.totalorder %s18, 1
    %p162 = por %p160, %p161
    %p163 = scmp.ne.s32.totalorder %s154, %s155
    %p164 = scmp.eq.s32.totalorder %s18, 0
    %p165 = por %p163, %p164
    %p166 = scmp.ne.s32.totalorder %s154, %s155
    %p167 = scmp.eq.s32.totalorder %s19, 1
    %p168 = por %p166, %p167
    %p170 = scmp.ne.s32.totalorder %s155, %s169
    %p171 = scmp.eq.s32.totalorder %s19, 0
    %p172 = por %p170, %p171
    %s173 = ssub.s32 %s13, %s20
    %p174 = scmp.eq.s32.totalorder %s173, 0
    %s176 = sadd.s32 %s175, 1
    %s177 = scalar_select %p174, %s175, %s176
    %p180 = pneg %p174
    %p181 = scmp.eq.s32.totalorder %s13, 1
    %p182 = por %p180, %p181
    %p183 = scmp.ne.s32.totalorder %s175, %s178
    %p184 = scmp.eq.s32.totalorder %s13, 0
    %p185 = por %p183, %p184
    %p186 = scmp.ne.s32.totalorder %s175, %s178
    %p187 = scmp.eq.s32.totalorder %s18, 1
    %p188 = por %p186, %p187
    %p189 = scmp.ne.s32.totalorder %s178, %s179
    %p190 = scmp.eq.s32.totalorder %s18, 0
    %p191 = por %p189, %p190
    %p192 = scmp.ne.s32.totalorder %s178, %s179
    %p193 = scmp.eq.s32.totalorder %s19, 1
    %p194 = por %p192, %p193
    %p196 = scmp.ne.s32.totalorder %s179, %s195
    %p197 = scmp.eq.s32.totalorder %s19, 0
    %p198 = por %p196, %p197
    %p199 = scmp.le.s32.totalorder 1, %s13
    %p200 = scmp.lt.s32.totalorder %s13, 3
    %p201 = pnand %p199, %p200
    %p202 = pneg %p201
    // Predicated region
    $region9: #{spa_block.1} parent=5 // pred_check
      _
    $region10: #{spa_block.1} parent=5 // pred_check_branch
      %204 = sbr.rel (%p201) target = $region12
    $region11: #{spa_block.1} parent=5 // pred_region
      %s205 = ssub.s32 %s13, 1
      // Predicated region
      $region13: #{spa_block.1} parent=11 // pred_check
        %p206 = pneg %p60
      $region14: #{spa_block.1} parent=11 // pred_check_branch
        %208 = sbr.rel (%p206) target = $region16
      $region15: #{spa_block.1} parent=11 // pred_region
        _
      $region16: #{spa_block.1} parent=11 // pred_fallthru
        _
      // Predicated region
      $region17: #{spa_block.1} parent=11 // pred_check
        %p209 = pneg %p81
      $region18: #{spa_block.1} parent=11 // pred_check_branch
        %211 = sbr.rel (%p209) target = $region20
      $region19: #{spa_block.1} parent=11 // pred_region
        _
      $region20: #{spa_block.1} parent=11 // pred_fallthru
        _
      // Predicated region
      $region21: #{spa_block.1} parent=11 // pred_check
        %p212 = pneg %p102
      $region22: #{spa_block.1} parent=11 // pred_check_branch
        %214 = sbr.rel (%p212) target = $region24
      $region23: #{spa_block.1} parent=11 // pred_region
        _
      $region24: #{spa_block.1} parent=11 // pred_fallthru
        _
      // Predicated region
      $region25: #{spa_block.1} parent=11 // pred_check
        %p215 = pneg %p123
      $region26: #{spa_block.1} parent=11 // pred_check_branch
        %217 = sbr.rel (%p215) target = $region28
      $region27: #{spa_block.1} parent=11 // pred_region
        _
      $region28: #{spa_block.1} parent=11 // pred_fallthru
        _
      // Predicated region
      $region29: #{spa_block.1} parent=11 // pred_check
        %p218 = pneg %p144
      $region30: #{spa_block.1} parent=11 // pred_check_branch
        %220 = sbr.rel (%p218) target = $region32
      $region31: #{spa_block.1} parent=11 // pred_region
        _
      $region32: #{spa_block.1} parent=11 // pred_fallthru
        _
      // Predicated region
      $region33: #{spa_block.1} parent=11 // pred_check
        %p221 = pneg %p165
      $region34: #{spa_block.1} parent=11 // pred_check_branch
        %223 = sbr.rel (%p221) target = $region36
      $region35: #{spa_block.1} parent=11 // pred_region
        _
      $region36: #{spa_block.1} parent=11 // pred_fallthru
        _
    $region12: #{spa_block.1} parent=5 // pred_fallthru
      _
    %p224 = scmp.lt.s32.totalorder %s13, 2
    // Predicated region
    $region37: #{spa_block.1} parent=5 // pred_check
      %p225 = pneg %p224
    $region38: #{spa_block.1} parent=5 // pred_check_branch
      %227 = sbr.rel (%p225) target = $region40
    $region39: #{spa_block.1} parent=5 // pred_region
      // Predicated region
      $region41: #{spa_block.1} parent=39 // pred_check
        %p228 = pneg %p33
      $region42: #{spa_block.1} parent=39 // pred_check_branch
        %230 = sbr.rel (%p228) target = $region44
      $region43: #{spa_block.1} parent=39 // pred_region
        %p231 = scmp.lt.s32.totalorder %s13, 1
        %s232 = scalar_select %p231, %s13, 1
        %s233 = smul.addr %s232, 2
        %s234 = smul.addr %s233, 4
        %s235 = scalar_lea.vmem %s0, %s234
      $region44: #{spa_block.1} parent=39 // pred_fallthru
        _
    $region40: #{spa_block.1} parent=5 // pred_fallthru
      _
    %p236 = scmp.le.s32.totalorder 1, %s13
    %p237 = scmp.lt.s32.totalorder %s13, 3
    %p238 = pnand %p236, %p237
    %p239 = pneg %p238
    // Predicated region
    $region45: #{spa_block.1} parent=5 // pred_check
      _
    $region46: #{spa_block.1} parent=5 // pred_check_branch
      %241 = sbr.rel (%p238) target = $region48
    $region47: #{spa_block.1} parent=5 // pred_region
      %s242 = ssub.s32 %s13, 1
      %p243 = scmp.lt.s32.totalorder %s18, 1
      %s244 = scalar_select %p243, %s18, 1
      %s245 = smul.addr %s244, 2
      %s246 = smul.addr %s245, 4
      %s247 = scalar_lea.vmem %s0, %s246
      %p248 = pneg %p39
      %p249 = pneg %p36
      %p250 = pneg %p60
      %p251 = pneg %p57
      %p252 = pneg %p81
      %p253 = pneg %p78
      %p254 = pneg %p102
      %p255 = pneg %p99
      %p256 = pneg %p123
      %p257 = pneg %p120
      %p258 = pneg %p144
      %p259 = pneg %p141
      %p260 = pneg %p165
      %p261 = pneg %p162
      %p262 = pneg %p191
      %p263 = pneg %p188
      %p264 = scmp.lt.s32.totalorder %s18, 1
      %s265 = scalar_select %p264, %s18, 1
      %s266 = smul.addr %s265, 2
      %s267 = smul.addr %s266, 4
      %s268 = scalar_lea.vmem %s7, %s267
      %p269 = scmp.lt.s32.totalorder %s18, 1
      %s270 = scalar_select %p269, %s18, 1
      %s271 = smul.addr %s270, 2
      %s272 = smul.addr %s271, 4
      %s273 = scalar_lea.vmem %s0, %s272
      %p274 = scmp.lt.s32.totalorder %s18, 1
      %s275 = scalar_select %p274, %s18, 1
      %s276 = smul.addr %s275, 2
      %s277 = smul.addr %s276, 4
      %s278 = scalar_lea.vmem %s7, %s277
      %vm279 = vcmask 1044344
      %280 = vst.msk [vmem:[#allocation2] sm:$0xf] %vm279, 0.0
      %vm281 = vcmask 134144
      %282 = vst.msk [vmem:[#allocation2 + $0xc] sm:$0xf] %vm281, 0.0
      %v283 = vld [vmem:[%s273] sm:$0xff]
      %v284 = vlaneseq
      %v285 = vand.u32 %v284, 127
      %v286 = vadd.s32 %v285, 128
      %vm287 = vcmp.lt.s32.totalorder %v285, 0
      %v288 = vsub.s32 0, %v285
      %v289 = vsel %vm287, %v288, %v285
      %v290 = vshrl.u32 %v289, 4
      %v291 = vand.u32 %v289, 15
      %v292 = vsub.s32 0, %v291
      %v293 = vsel %vm287, %v292, %v291
      %vm294 = vcmp.lt.s32.totalorder %v286, 0
      %v295 = vsub.s32 0, %v286
      %v296 = vsel %vm294, %v295, %v286
      %v297 = vshrl.u32 %v296, 4
      %v298 = vand.u32 %v296, 15
      %v299 = vsub.s32 0, %v298
      %v300 = vsel %vm294, %v299, %v298
      %vm301 = vcmp.ne.s32.totalorder %v293, 0
      %vm302 = vcmp.ne.s32.totalorder %v300, 0
      %vm303 = vcmp.lt.s32.totalorder %v293, 0
      %vm304 = vcmp.lt.s32.totalorder %v300, 0
      %vm305 = vmand %vm303, %vm301
      %vm306 = vmand %vm304, %vm302
      %v307 = vadd.s32 %v293, 16
      %v308 = vadd.s32 %v300, 16
      %v309 = vsel %vm305, %v307, %v293
      %v310 = vsel %vm306, %v308, %v300
      %vm311 = vcmp.ge.s32.totalorder %v309, 1
      %vm312 = vcmp.ge.s32.totalorder %v310, 1
      %v313 = vsel %vm311, 1, 0
      %v314 = vsel %vm312, 1, 0
      %v315 = vcvt.s32.f32 %v313
      %v316 = vcvt.s32.f32 %v314
      %vm317 = vcmp.le.s32.totalorder %v309, 14
      %vm318 = vcmp.le.s32.totalorder %v310, 14
      %v319 = vsel %vm317, 1, 0
      %v320 = vsel %vm318, 1, 0
      %v321 = vcvt.s32.f32 %v319
      %v322 = vcvt.s32.f32 %v320
      %v323 = vld [vmem:[%s3] sm:$0xf]
      %v324 = vld [vmem:[%s3 + $0x4] sm:$0x3]
      %v325 = vld [vmem:[%s3 + $0x6] sm:$0x1]
      %v326 = vld [vmem:[%s3 + $0x7] sm:$0x1]
      %v328 = vrot.slane %v283, 6
      %v329 = vrot.slane %v328, 4
      %331 = vst [vmem:[#allocation2 + $0x4] sm:$0x33] %v329
      %v332 = vld [vmem:[#allocation2] sm:$0x33]
      %v333 = vld [vmem:[#allocation2 + $0x8] sm:$0x3]
      %v336 = vrot.slane %v316, 4
      %vm337 = vcmask 1043456
      %v338 = vsel %vm337, %v315, %v336
      %339 = vrot.lane.b32.xlu0 %v338, 111
      %v340 = vpop.permute.xlu0 %339
      %v341 = vrot.slane %v340, 4
      %vm342 = vcmask 908288
      %v343 = vsel %vm342, %v341, %v340
      %v346 = vmul.f32 %v332, %v343
      %v347 = vmul.f32 %v333, %v341
      %350 = vst [vmem:[#allocation1] ss:$2 sm:$0xff] %v346
      %s351 = scalar_lea.vmem [#allocation1], 16
      %352 = vst [vmem:[%s351] ss:$2 sm:$0xff] %v347
      %v353 = vld.sshfl [vmem:[#allocation1] sm:$0xff pattern:$0x75316420]
      %v354 = vld.sshfl [vmem:[#allocation1 + $0x8] sm:$0xff pattern:$0x75316420]
      %v355 = vld.sshfl [vmem:[#allocation1 + $0x10] sm:$0xff pattern:$0x75316420]
      %356 = vrot.lane.b32.xlu0 %v353, 17
      %v357 = vpop.permute.xlu0 %356
      %358 = vrot.lane.b32.xlu0 %v354, 17
      %v359 = vpop.permute.xlu0 %358
      %360 = vrot.lane.b32.xlu0 %v355, 17
      %v361 = vpop.permute.xlu0 %360
      %vm362 = vcmask 138240
      %v363 = vsel %vm362, %v357, %v359
      %v364 = vsel %vm362, %v359, %v361
      %367 = vst [vmem:[#allocation3] sm:$0x3] %v363
      %368 = vst [vmem:[#allocation3 + $0x8] sm:$0x3] %v364
      %v369 = vld [vmem:[#allocation2] sm:$0x33]
      %v370 = vld [vmem:[#allocation2 + $0x8] sm:$0x3]
      %373 = vst [vmem:[#allocation1] ss:$2 sm:$0xff] %v369
      %s374 = scalar_lea.vmem [#allocation1], 16
      %375 = vst [vmem:[%s374] ss:$2 sm:$0xff] %v370
      %v376 = vld.sshfl [vmem:[#allocation1] sm:$0xff pattern:$0x75316420]
      %v377 = vld.sshfl [vmem:[#allocation1 + $0x8] sm:$0xff pattern:$0x75316420]
      %v378 = vld.sshfl [vmem:[#allocation1 + $0x10] sm:$0xff pattern:$0x75316420]
      %v379 = vrot.slane %v376, 6
      %v380 = vrot.slane %v377, 6
      %v381 = vrot.slane %v378, 6
      %382 = vrot.lane.b32.xlu0 %v379, 16
      %v383 = vpop.permute.xlu0 %382
      %384 = vrot.lane.b32.xlu0 %v380, 16
      %v385 = vpop.permute.xlu0 %384
      %386 = vrot.lane.b32.xlu0 %v381, 16
      %v387 = vpop.permute.xlu0 %386
      %vm388 = vcmask 130048
      %v389 = vsel %vm388, %v383, %v385
      %v390 = vsel %vm388, %v385, %v387
      %393 = vst [vmem:[#allocation3] sm:$0xc] %v389
      %394 = vst [vmem:[#allocation3 + $0x8] sm:$0xc] %v390
      %v395 = vld [vmem:[#allocation2] sm:$0x33]
      %v396 = vld [vmem:[#allocation2 + $0x8] sm:$0x3]
      %v399 = vrot.slane %v322, 4
      %v400 = vsel %vm337, %v321, %v399
      %401 = vrot.lane.b32.xlu0 %v400, 113
      %v402 = vpop.permute.xlu0 %401
      %v403 = vrot.slane %v402, 4
      %vm404 = vcmask 924672
      %v405 = vsel %vm404, %v403, %v402
      %v408 = vmul.f32 %v395, %v405
      %v409 = vmul.f32 %v396, %v403
      %s412 = scalar_lea.vmem [#allocation1], 1
      %413 = vst [vmem:[%s412] ss:$2 sm:$0xff] %v408
      %s414 = scalar_lea.vmem [#allocation1], 17
      %415 = vst [vmem:[%s414] ss:$2 sm:$0xff] %v409
      %v416 = vld.sshfl [vmem:[#allocation1] sm:$0xff pattern:$0x75316420]
      %v417 = vld.sshfl [vmem:[#allocation1 + $0x8] sm:$0xff pattern:$0x75316420]
      %v418 = vld.sshfl [vmem:[#allocation1 + $0x10] sm:$0xff pattern:$0x75316420]
      %419 = vrot.lane.b32.xlu0 %v416, 15
      %v420 = vpop.permute.xlu0 %419
      %421 = vrot.lane.b32.xlu0 %v417, 15
      %v422 = vpop.permute.xlu0 %421
      %423 = vrot.lane.b32.xlu0 %v418, 15
      %v424 = vpop.permute.xlu0 %423
      %vm425 = vcmask 121856
      %v426 = vsel %vm425, %v420, %v422
      %v427 = vsel %vm425, %v422, %v424
      %430 = vst [vmem:[#allocation3] sm:$0x30] %v426
      %431 = vst [vmem:[#allocation3 + $0x8] sm:$0x30] %v427
      %v432 = vld [vmem:[#allocation2] sm:$0x33]
      %v433 = vld [vmem:[#allocation2 + $0x8] sm:$0x3]
      %434 = vrot.lane.b32.xlu0 %v338, 127
      %v435 = vpop.permute.xlu0 %434
      %v436 = vrot.slane %v435, 4
      %vm437 = vcmask 1039360
      %v438 = vsel %vm437, %v436, %v435
      %v441 = vmul.f32 %v432, %v438
      %v442 = vmul.f32 %v433, %v436
      %445 = vst [vmem:[#allocation1] ss:$2 sm:$0xff] %v441
      %s446 = scalar_lea.vmem [#allocation1], 16
      %447 = vst [vmem:[%s446] ss:$2 sm:$0xff] %v442
      %v448 = vld.sshfl [vmem:[#allocation1] sm:$0xff pattern:$0x75316420]
      %v449 = vld.sshfl [vmem:[#allocation1 + $0x8] sm:$0xff pattern:$0x75316420]
      %v450 = vld.sshfl [vmem:[#allocation1 + $0x10] sm:$0xff pattern:$0x75316420]
      %v451 = vrot.slane %v448, 2
      %v452 = vrot.slane %v449, 2
      %v453 = vrot.slane %v450, 2
      %454 = vrot.lane.b32.xlu0 %v451, 1
      %v455 = vpop.permute.xlu0 %454
      %456 = vrot.lane.b32.xlu0 %v452, 1
      %v457 = vpop.permute.xlu0 %456
      %458 = vrot.lane.b32.xlu0 %v453, 1
      %v459 = vpop.permute.xlu0 %458
      %vm460 = vcmask 7168
      %v461 = vsel %vm460, %v455, %v457
      %v462 = vsel %vm460, %v457, %v459
      %465 = vst [vmem:[#allocation3] sm:$0xc0] %v461
      %466 = vst [vmem:[#allocation3 + $0x8] sm:$0xc0] %v462
      %v467 = vld [vmem:[#allocation2 + $0x4] sm:$0x33]
      %469 = vst [vmem:[#allocation1] ss:$2 sm:$0xff] %v467
      %v470 = vld.sshfl [vmem:[#allocation1] sm:$0xff pattern:$0x75316420]
      %v471 = vld.sshfl [vmem:[#allocation1 + $0x8] sm:$0xff pattern:$0x75316420]
      %474 = vst [vmem:[#allocation3 + $0x10] sm:$0x3] %v470
      %475 = vst [vmem:[#allocation3 + $0x18] sm:$0x3] %v471
      %v476 = vld [vmem:[#allocation2 + $0x4] sm:$0x33]
      %v477 = vld [vmem:[#allocation2 + $0xc] sm:$0x3]
      %478 = vrot.lane.b32.xlu0 %v400, 1
      %v479 = vpop.permute.xlu0 %478
      %v480 = vrot.slane %v479, 4
      %v481 = vsel %vm460, %v480, %v479
      %v484 = vmul.f32 %v476, %v481
      %v485 = vmul.f32 %v477, %v480
      %488 = vst [vmem:[#allocation1] ss:$2 sm:$0xff] %v484
      %s489 = scalar_lea.vmem [#allocation1], 16
      %490 = vst [vmem:[%s489] ss:$2 sm:$0xff] %v485
      %v491 = vld.sshfl [vmem:[#allocation1] sm:$0xff pattern:$0x75316420]
      %v492 = vld.sshfl [vmem:[#allocation1 + $0x8] sm:$0xff pattern:$0x75316420]
      %v493 = vld.sshfl [vmem:[#allocation1 + $0x10] sm:$0xff pattern:$0x75316420]
      %v494 = vrot.slane %v491, 6
      %v495 = vrot.slane %v492, 6
      %v496 = vrot.slane %v493, 6
      %497 = vrot.lane.b32.xlu0 %v494, 127
      %v498 = vpop.permute.xlu0 %497
      %499 = vrot.lane.b32.xlu0 %v495, 127
      %v500 = vpop.permute.xlu0 %499
      %501 = vrot.lane.b32.xlu0 %v496, 127
      %v502 = vpop.permute.xlu0 %501
      %v503 = vsel %vm437, %v498, %v500
      %v504 = vsel %vm437, %v500, %v502
      %507 = vst [vmem:[#allocation3 + $0x10] sm:$0xc] %v503
      %508 = vst [vmem:[#allocation3 + $0x18] sm:$0xc] %v504
      %v509 = vld [vmem:[#allocation2 + $0x4] sm:$0x33]
      %v510 = vld [vmem:[#allocation2 + $0xc] sm:$0x3]
      %511 = vrot.lane.b32.xlu0 %v338, 15
      %v512 = vpop.permute.xlu0 %511
      %v513 = vrot.slane %v512, 4
      %v514 = vsel %vm425, %v513, %v512
      %v517 = vmul.f32 %v509, %v514
      %v518 = vmul.f32 %v510, %v513
      %s521 = scalar_lea.vmem [#allocation1], 1
      %522 = vst [vmem:[%s521] ss:$2 sm:$0xff] %v517
      %s523 = scalar_lea.vmem [#allocation1], 17
      %524 = vst [vmem:[%s523] ss:$2 sm:$0xff] %v518
      %v525 = vld.sshfl [vmem:[#allocation1] sm:$0xff pattern:$0x75316420]
      %v526 = vld.sshfl [vmem:[#allocation1 + $0x8] sm:$0xff pattern:$0x75316420]
      %v527 = vld.sshfl [vmem:[#allocation1 + $0x10] sm:$0xff pattern:$0x75316420]
      %528 = vrot.lane.b32.xlu0 %v525, 113
      %v529 = vpop.permute.xlu0 %528
      %530 = vrot.lane.b32.xlu0 %v526, 113
      %v531 = vpop.permute.xlu0 %530
      %532 = vrot.lane.b32.xlu0 %v527, 113
      %v533 = vpop.permute.xlu0 %532
      %v534 = vsel %vm404, %v529, %v531
      %v535 = vsel %vm404, %v531, %v533
      %538 = vst [vmem:[#allocation3 + $0x10] sm:$0x30] %v534
      %539 = vst [vmem:[#allocation3 + $0x18] sm:$0x30] %v535
      %v540 = vld [vmem:[#allocation2 + $0x4] sm:$0x33]
      %v541 = vld [vmem:[#allocation2 + $0xc] sm:$0x3]
      %544 = vst [vmem:[#allocation1] ss:$2 sm:$0xff] %v540
      %s545 = scalar_lea.vmem [#allocation1], 16
      %546 = vst [vmem:[%s545] ss:$2 sm:$0xff] %v541
      %v547 = vld.sshfl [vmem:[#allocation1] sm:$0xff pattern:$0x75316420]
      %v548 = vld.sshfl [vmem:[#allocation1 + $0x8] sm:$0xff pattern:$0x75316420]
      %v549 = vld.sshfl [vmem:[#allocation1 + $0x10] sm:$0xff pattern:$0x75316420]
      %v550 = vrot.slane %v547, 2
      %v551 = vrot.slane %v548, 2
      %v552 = vrot.slane %v549, 2
      %553 = vrot.lane.b32.xlu0 %v550, 112
      %v554 = vpop.permute.xlu0 %553
      %555 = vrot.lane.b32.xlu0 %v551, 112
      %v556 = vpop.permute.xlu0 %555
      %557 = vrot.lane.b32.xlu0 %v552, 112
      %v558 = vpop.permute.xlu0 %557
      %vm559 = vcmask 916480
      %v560 = vsel %vm559, %v554, %v556
      %v561 = vsel %vm559, %v556, %v558
      %564 = vst [vmem:[#allocation3 + $0x10] sm:$0xc0] %v560
      %565 = vst [vmem:[#allocation3 + $0x18] sm:$0xc0] %v561
      %v566 = vld [vmem:[#allocation2 + $0x4] sm:$0x33]
      %v567 = vld [vmem:[#allocation2 + $0xc] sm:$0x3]
      %568 = vrot.lane.b32.xlu0 %v400, 17
      %v569 = vpop.permute.xlu0 %568
      %v570 = vrot.slane %v569, 4
      %v571 = vsel %vm362, %v570, %v569
      %v574 = vmul.f32 %v566, %v571
      %v575 = vmul.f32 %v567, %v570
      %578 = vst [vmem:[#allocation1] ss:$2 sm:$0xff] %v574
      %s579 = scalar_lea.vmem [#allocation1], 16
      %580 = vst [vmem:[%s579] ss:$2 sm:$0xff] %v575
      %v581 = vld.sshfl [vmem:[#allocation1] sm:$0xff pattern:$0x75316420]
      %v582 = vld.sshfl [vmem:[#allocation1 + $0x8] sm:$0xff pattern:$0x75316420]
      %v583 = vld.sshfl [vmem:[#allocation1 + $0x10] sm:$0xff pattern:$0x75316420]
      %584 = vrot.lane.b32.xlu0 %v581, 111
      %v585 = vpop.permute.xlu0 %584
      %586 = vrot.lane.b32.xlu0 %v582, 111
      %v587 = vpop.permute.xlu0 %586
      %588 = vrot.lane.b32.xlu0 %v583, 111
      %v589 = vpop.permute.xlu0 %588
      %v590 = vsel %vm342, %v585, %v587
      %v591 = vsel %vm342, %v587, %v589
      %594 = vst [vmem:[#allocation3 + $0x20] sm:$0x3] %v590
      %595 = vst [vmem:[#allocation3 + $0x28] sm:$0x3] %v591
      %v596 = vld [vmem:[%s1] sm:$0xf]
      %v597 = vld [vmem:[#allocation3] sm:$0xff]
      %v598 = vld [vmem:[#allocation3 + $0x8] sm:$0xff]
      %v599 = vld [vmem:[#allocation3 + $0x10] sm:$0xff]
      %v600 = vld [vmem:[#allocation3 + $0x18] sm:$0xff]
      %v601 = vld [vmem:[#allocation3 + $0x20] sm:$0x3]
      %v602 = vld [vmem:[#allocation3 + $0x28] sm:$0x3]
      %604 = vset.pattern.permute.xlu0 0
      %605 = vperm.xlu0 %604, %v323
      %v606 = vpop.permute.xlu0 %605
      %vm608 = vcmask 146432
      %v610 = vsel %vm608, %v596, 0
      %vm612 = vcmask 1041408
      %v614 = vsel %vm612, %v601, 0
      %v617 = vsel %vm612, %v602, 0
      %619 = vmatpush.msra.mxu0 0.0
      %620 = vmatpush.msra.mxu0 0.0
      %621 = vmatpush.msra.mxu0 0.0
      %622 = vmatpush.msra.mxu0 0.0
      %623 = vmatpush.msra.mxu0 0.0
      %624 = vmatpush.msra.mxu0 0.0
      %625 = vmatpush.msra.mxu0 0.0
      %626 = vmatpush.msra.mxu0 0.0
      %627 = vmatpush.msra.mxu0 0.0
      %628 = vmatpush.msra.mxu0 0.0
      %629 = vmatpush.msra.mxu0 0.0
      %630 = vmatpush.msra.mxu0 0.0
      %631 = vmatpush.msra.mxu0 0.0
      %632 = vmatpush.msra.mxu0 %v614
      %633 = vmatpush.msra.mxu0 %v599
      %634 = vmatpush.msra.mxu0 %v597
      %635 = vmatmul.f32.gmra.mxu0 %v610
      %v636 = vpop.f32.mrf.mxu0
      %v637 = vadd.f32 %v606, %v636
      %638 = vdwg.mxu0
      %639 = vmatpush.msra.mxu0 0.0
      %640 = vmatpush.msra.mxu0 0.0
      %641 = vmatpush.msra.mxu0 0.0
      %642 = vmatpush.msra.mxu0 0.0
      %643 = vmatpush.msra.mxu0 0.0
      %644 = vmatpush.msra.mxu0 0.0
      %645 = vmatpush.msra.mxu0 0.0
      %646 = vmatpush.msra.mxu0 0.0
      %647 = vmatpush.msra.mxu0 0.0
      %648 = vmatpush.msra.mxu0 0.0
      %649 = vmatpush.msra.mxu0 0.0
      %650 = vmatpush.msra.mxu0 0.0
      %651 = vmatpush.msra.mxu0 0.0
      %652 = vmatpush.msra.mxu0 %v617
      %653 = vmatpush.msra.mxu0 %v600
      %654 = vmatpush.msra.mxu0 %v598
      %655 = vmatmul.f32.gmra.mxu0 %v610
      %v656 = vpop.f32.mrf.mxu0
      %v657 = vadd.f32 %v606, %v656
      %658 = vdwg.mxu0
      %vm659 = vcmask 1040384
      %v660 = vsel %vm659, %v637, 0.0
      %v661 = vsel %vm659, %v657, 0.0
      %v662 = vadd.f32 %v660, %v661
      %663 = vadd.xlane.f32.xlu0 %v662
      %v664 = vpop.xlane.xlu0 %663
      %v665 = vrcp.pop 256.0
      %v666 = vmul.f32 256.0, %v665
      %v667 = vsub.f32 1.0, %v666
      %v668 = vmul.f32 %v665, %v667
      %v669 = vadd.f32 %v665, %v668
      %vm670 = vweird.f32 %v665
      %v671 = vsel %vm670, %v665, %v669
      %v672 = vmul.f32 %v664, %v671
      %v673 = vsub.f32 %v637, %v672
      %v674 = vsub.f32 %v657, %v672
      %v675 = vmul.f32 %v673, %v673
      %v676 = vmul.f32 %v674, %v674
      %v677 = vsel %vm659, %v675, 0.0
      %v678 = vsel %vm659, %v676, 0.0
      %v679 = vadd.f32 %v677, %v678
      %680 = vadd.xlane.f32.xlu0 %v679
      %v681 = vpop.xlane.xlu0 %680
      %v682 = vmul.f32 %v681, %v671
      %v683 = vadd.f32 %v682, 1e-05
      %v684 = vrsqrt.pop %v683
      %v685 = vmul.f32 %v684, %v683
      %v686 = vmul.f32 %v685, %v684
      %v687 = vmul.f32 0.5, %v686
      %v688 = vsub.f32 1.5, %v687
      %v689 = vmul.f32 %v684, %v688
      %vm690 = vweird.f32 %v683
      %vm691 = vweird.f32 %v684
      %vm692 = vmor %vm690, %vm691
      %v693 = vsel %vm692, %v684, %v689
      %v694 = vmul.f32 %v673, %v693
      %v695 = vmul.f32 %v674, %v693
      %697 = vset.pattern.permute.xlu0 0
      %698 = vperm.xlu0 %697, %v325
      %v699 = vpop.permute.xlu0 %698
      %v701 = vmul.f32 %v694, %v699
      %v702 = vmul.f32 %v695, %v699
      %704 = vset.pattern.permute.xlu0 0
      %705 = vperm.xlu0 %704, %v326
      %v706 = vpop.permute.xlu0 %705
      %v708 = vadd.f32 %v701, %v706
      %v709 = vadd.f32 %v702, %v706
      %v710 = vsel %vm659, %v708, %v637
      %v711 = vsel %vm659, %v709, %v657
      %vm712 = vcmp.ge.f32.partialorder %v710, 0.0
      %vm713 = vcmp.ge.f32.partialorder %v711, 0.0
      %v714 = vmul.f32 %v710, 0.1
      %v715 = vmul.f32 %v711, 0.1
      %v716 = vsel %vm712, %v710, %v714
      %v717 = vsel %vm713, %v711, %v715
      %v720 = vrot.slane %v717, 4
      %v721 = vsel %vm337, %v716, %v720
      %723 = vst [vmem:[#allocation2 + $0x4] sm:$0x33] %v721
      %v724 = vld [vmem:[#allocation2] sm:$0x33]
      %v725 = vld [vmem:[#allocation2 + $0x8] sm:$0x3]
      %v726 = vmul.f32 %v724, %v343
      %v727 = vmul.f32 %v725, %v341
      %730 = vst [vmem:[#allocation1] ss:$2 sm:$0xff] %v726
      %s731 = scalar_lea.vmem [#allocation1], 16
      %732 = vst [vmem:[%s731] ss:$2 sm:$0xff] %v727
      %v733 = vld.sshfl [vmem:[#allocation1] sm:$0xff pattern:$0x75316420]
      %v734 = vld.sshfl [vmem:[#allocation1 + $0x8] sm:$0xff pattern:$0x75316420]
      %v735 = vld.sshfl [vmem:[#allocation1 + $0x10] sm:$0xff pattern:$0x75316420]
      %736 = vrot.lane.b32.xlu0 %v733, 17
      %v737 = vpop.permute.xlu0 %736
      %738 = vrot.lane.b32.xlu0 %v734, 17
      %v739 = vpop.permute.xlu0 %738
      %740 = vrot.lane.b32.xlu0 %v735, 17
      %v741 = vpop.permute.xlu0 %740
      %v742 = vsel %vm362, %v737, %v739
      %v743 = vsel %vm362, %v739, %v741
      %746 = vst [vmem:[#allocation3] sm:$0x3] %v742
      %747 = vst [vmem:[#allocation3 + $0x8] sm:$0x3] %v743
      %v748 = vld [vmem:[#allocation2] sm:$0x33]
      %v749 = vld [vmem:[#allocation2 + $0x8] sm:$0x3]
      %752 = vst [vmem:[#allocation1] ss:$2 sm:$0xff] %v748
      %s753 = scalar_lea.vmem [#allocation1], 16
      %754 = vst [vmem:[%s753] ss:$2 sm:$0xff] %v749
      %v755 = vld.sshfl [vmem:[#allocation1] sm:$0xff pattern:$0x75316420]
      %v756 = vld.sshfl [vmem:[#allocation1 + $0x8] sm:$0xff pattern:$0x75316420]
      %v757 = vld.sshfl [vmem:[#allocation1 + $0x10] sm:$0xff pattern:$0x75316420]
      %v758 = vrot.slane %v755, 6
      %v759 = vrot.slane %v756, 6
      %v760 = vrot.slane %v757, 6
      %761 = vrot.lane.b32.xlu0 %v758, 16
      %v762 = vpop.permute.xlu0 %761
      %763 = vrot.lane.b32.xlu0 %v759, 16
      %v764 = vpop.permute.xlu0 %763
      %765 = vrot.lane.b32.xlu0 %v760, 16
      %v766 = vpop.permute.xlu0 %765
      %v767 = vsel %vm388, %v762, %v764
      %v768 = vsel %vm388, %v764, %v766
      %771 = vst [vmem:[#allocation3] sm:$0xc] %v767
      %772 = vst [vmem:[#allocation3 + $0x8] sm:$0xc] %v768
      %v773 = vld [vmem:[#allocation2] sm:$0x33]
      %v774 = vld [vmem:[#allocation2 + $0x8] sm:$0x3]
      %v775 = vmul.f32 %v773, %v405
      %v776 = vmul.f32 %v774, %v403
      %s779 = scalar_lea.vmem [#allocation1], 1
      %780 = vst [vmem:[%s779] ss:$2 sm:$0xff] %v775
      %s781 = scalar_lea.vmem [#allocation1], 17
      %782 = vst [vmem:[%s781] ss:$2 sm:$0xff] %v776
      %v783 = vld.sshfl [vmem:[#allocation1] sm:$0xff pattern:$0x75316420]
      %v784 = vld.sshfl [vmem:[#allocation1 + $0x8] sm:$0xff pattern:$0x75316420]
      %v785 = vld.sshfl [vmem:[#allocation1 + $0x10] sm:$0xff pattern:$0x75316420]
      %786 = vrot.lane.b32.xlu0 %v783, 15
      %v787 = vpop.permute.xlu0 %786
      %788 = vrot.lane.b32.xlu0 %v784, 15
      %v789 = vpop.permute.xlu0 %788
      %790 = vrot.lane.b32.xlu0 %v785, 15
      %v791 = vpop.permute.xlu0 %790
      %v792 = vsel %vm425, %v787, %v789
      %v793 = vsel %vm425, %v789, %v791
      %796 = vst [vmem:[#allocation3] sm:$0x30] %v792
      %797 = vst [vmem:[#allocation3 + $0x8] sm:$0x30] %v793
      %v798 = vld [vmem:[#allocation2] sm:$0x33]
      %v799 = vld [vmem:[#allocation2 + $0x8] sm:$0x3]
      %v800 = vmul.f32 %v798, %v438
      %v801 = vmul.f32 %v799, %v436
      %804 = vst [vmem:[#allocation1] ss:$2 sm:$0xff] %v800
      %s805 = scalar_lea.vmem [#allocation1], 16
      %806 = vst [vmem:[%s805] ss:$2 sm:$0xff] %v801
      %v807 = vld.sshfl [vmem:[#allocation1] sm:$0xff pattern:$0x75316420]
      %v808 = vld.sshfl [vmem:[#allocation1 + $0x8] sm:$0xff pattern:$0x75316420]
      %v809 = vld.sshfl [vmem:[#allocation1 + $0x10] sm:$0xff pattern:$0x75316420]
      %v810 = vrot.slane %v807, 2
      %v811 = vrot.slane %v808, 2
      %v812 = vrot.slane %v809, 2
      %813 = vrot.lane.b32.xlu0 %v810, 1
      %v814 = vpop.permute.xlu0 %813
      %815 = vrot.lane.b32.xlu0 %v811, 1
      %v816 = vpop.permute.xlu0 %815
      %817 = vrot.lane.b32.xlu0 %v812, 1
      %v818 = vpop.permute.xlu0 %817
      %v819 = vsel %vm460, %v814, %v816
      %v820 = vsel %vm460, %v816, %v818
      %823 = vst [vmem:[#allocation3] sm:$0xc0] %v819
      %824 = vst [vmem:[#allocation3 + $0x8] sm:$0xc0] %v820
      %v825 = vld [vmem:[#allocation2 + $0x4] sm:$0x33]
      %827 = vst [vmem:[#allocation1] ss:$2 sm:$0xff] %v825
      %v828 = vld.sshfl [vmem:[#allocation1] sm:$0xff pattern:$0x75316420]
      %v829 = vld.sshfl [vmem:[#allocation1 + $0x8] sm:$0xff pattern:$0x75316420]
      %832 = vst [vmem:[#allocation3 + $0x10] sm:$0x3] %v828
      %833 = vst [vmem:[#allocation3 + $0x18] sm:$0x3] %v829
      %v834 = vld [vmem:[#allocation2 + $0x4] sm:$0x33]
      %v835 = vld [vmem:[#allocation2 + $0xc] sm:$0x3]
      %v836 = vmul.f32 %v834, %v481
      %v837 = vmul.f32 %v835, %v480
      %840 = vst [vmem:[#allocation1] ss:$2 sm:$0xff] %v836
      %s841 = scalar_lea.vmem [#allocation1], 16
      %842 = vst [vmem:[%s841] ss:$2 sm:$0xff] %v837
      %v843 = vld.sshfl [vmem:[#allocation1] sm:$0xff pattern:$0x75316420]
      %v844 = vld.sshfl [vmem:[#allocation1 + $0x8] sm:$0xff pattern:$0x75316420]
      %v845 = vld.sshfl [vmem:[#allocation1 + $0x10] sm:$0xff pattern:$0x75316420]
      %v846 = vrot.slane %v843, 6
      %v847 = vrot.slane %v844, 6
      %v848 = vrot.slane %v845, 6
      %849 = vrot.lane.b32.xlu0 %v846, 127
      %v850 = vpop.permute.xlu0 %849
      %851 = vrot.lane.b32.xlu0 %v847, 127
      %v852 = vpop.permute.xlu0 %851
      %853 = vrot.lane.b32.xlu0 %v848, 127
      %v854 = vpop.permute.xlu0 %853
      %v855 = vsel %vm437, %v850, %v852
      %v856 = vsel %vm437, %v852, %v854
      %859 = vst [vmem:[#allocation3 + $0x10] sm:$0xc] %v855
      %860 = vst [vmem:[#allocation3 + $0x18] sm:$0xc] %v856
      %v861 = vld [vmem:[#allocation2 + $0x4] sm:$0x33]
      %v862 = vld [vmem:[#allocation2 + $0xc] sm:$0x3]
      %v863 = vmul.f32 %v861, %v514
      %v864 = vmul.f32 %v862, %v513
      %s867 = scalar_lea.vmem [#allocation1], 1
      %868 = vst [vmem:[%s867] ss:$2 sm:$0xff] %v863
      %s869 = scalar_lea.vmem [#allocation1], 17
      %870 = vst [vmem:[%s869] ss:$2 sm:$0xff] %v864
      %v871 = vld.sshfl [vmem:[#allocation1] sm:$0xff pattern:$0x75316420]
      %v872 = vld.sshfl [vmem:[#allocation1 + $0x8] sm:$0xff pattern:$0x75316420]
      %v873 = vld.sshfl [vmem:[#allocation1 + $0x10] sm:$0xff pattern:$0x75316420]
      %874 = vrot.lane.b32.xlu0 %v871, 113
      %v875 = vpop.permute.xlu0 %874
      %876 = vrot.lane.b32.xlu0 %v872, 113
      %v877 = vpop.permute.xlu0 %876
      %878 = vrot.lane.b32.xlu0 %v873, 113
      %v879 = vpop.permute.xlu0 %878
      %v880 = vsel %vm404, %v875, %v877
      %v881 = vsel %vm404, %v877, %v879
      %884 = vst [vmem:[#allocation3 + $0x10] sm:$0x30] %v880
      %885 = vst [vmem:[#allocation3 + $0x18] sm:$0x30] %v881
      %v886 = vld [vmem:[#allocation2 + $0x4] sm:$0x33]
      %v887 = vld [vmem:[#allocation2 + $0xc] sm:$0x3]
      %890 = vst [vmem:[#allocation1] ss:$2 sm:$0xff] %v886
      %s891 = scalar_lea.vmem [#allocation1], 16
      %892 = vst [vmem:[%s891] ss:$2 sm:$0xff] %v887
      %v893 = vld.sshfl [vmem:[#allocation1] sm:$0xff pattern:$0x75316420]
      %v894 = vld.sshfl [vmem:[#allocation1 + $0x8] sm:$0xff pattern:$0x75316420]
      %v895 = vld.sshfl [vmem:[#allocation1 + $0x10] sm:$0xff pattern:$0x75316420]
      %v896 = vrot.slane %v893, 2
      %v897 = vrot.slane %v894, 2
      %v898 = vrot.slane %v895, 2
      %899 = vrot.lane.b32.xlu0 %v896, 112
      %v900 = vpop.permute.xlu0 %899
      %901 = vrot.lane.b32.xlu0 %v897, 112
      %v902 = vpop.permute.xlu0 %901
      %903 = vrot.lane.b32.xlu0 %v898, 112
      %v904 = vpop.permute.xlu0 %903
      %v905 = vsel %vm559, %v900, %v902
      %v906 = vsel %vm559, %v902, %v904
      %909 = vst [vmem:[#allocation3 + $0x10] sm:$0xc0] %v905
      %910 = vst [vmem:[#allocation3 + $0x18] sm:$0xc0] %v906
      %v911 = vld [vmem:[#allocation2 + $0x4] sm:$0x33]
      %v912 = vld [vmem:[#allocation2 + $0xc] sm:$0x3]
      %v913 = vmul.f32 %v911, %v571
      %v914 = vmul.f32 %v912, %v570
      %917 = vst [vmem:[#allocation1] ss:$2 sm:$0xff] %v913
      %s918 = scalar_lea.vmem [#allocation1], 16
      %919 = vst [vmem:[%s918] ss:$2 sm:$0xff] %v914
      %v920 = vld.sshfl [vmem:[#allocation1] sm:$0xff pattern:$0x75316420]
      %v921 = vld.sshfl [vmem:[#allocation1 + $0x8] sm:$0xff pattern:$0x75316420]
      %v922 = vld.sshfl [vmem:[#allocation1 + $0x10] sm:$0xff pattern:$0x75316420]
      %923 = vrot.lane.b32.xlu0 %v920, 111
      %v924 = vpop.permute.xlu0 %923
      %925 = vrot.lane.b32.xlu0 %v921, 111
      %v926 = vpop.permute.xlu0 %925
      %927 = vrot.lane.b32.xlu0 %v922, 111
      %v928 = vpop.permute.xlu0 %927
      %v929 = vsel %vm342, %v924, %v926
      %v930 = vsel %vm342, %v926, %v928
      %933 = vst [vmem:[#allocation3 + $0x20] sm:$0x3] %v929
      %934 = vst [vmem:[#allocation3 + $0x28] sm:$0x3] %v930
      %v935 = vld [vmem:[%s2] sm:$0x3]
      %v936 = vld [vmem:[#allocation3] sm:$0xff]
      %v937 = vld [vmem:[#allocation3 + $0x8] sm:$0xff]
      %v938 = vld [vmem:[#allocation3 + $0x10] sm:$0xff]
      %v939 = vld [vmem:[#allocation3 + $0x18] sm:$0xff]
      %v940 = vld [vmem:[#allocation3 + $0x20] sm:$0x3]
      %v941 = vld [vmem:[#allocation3 + $0x28] sm:$0x3]
      %943 = vset.pattern.permute.xlu0 0
      %944 = vperm.xlu0 %943, %v324
      %v945 = vpop.permute.xlu0 %944
      %v948 = vsel %vm608, %v935, 0
      %v951 = vsel %vm612, %v940, 0
      %v954 = vsel %vm612, %v941, 0
      %956 = vmatpush.msra.mxu0 0.0
      %957 = vmatpush.msra.mxu0 0.0
      %958 = vmatpush.msra.mxu0 0.0
      %959 = vmatpush.msra.mxu0 0.0
      %960 = vmatpush.msra.mxu0 0.0
      %961 = vmatpush.msra.mxu0 0.0
      %962 = vmatpush.msra.mxu0 0.0
      %963 = vmatpush.msra.mxu0 0.0
      %964 = vmatpush.msra.mxu0 0.0
      %965 = vmatpush.msra.mxu0 0.0
      %966 = vmatpush.msra.mxu0 0.0
      %967 = vmatpush.msra.mxu0 0.0
      %968 = vmatpush.msra.mxu0 0.0
      %969 = vmatpush.msra.mxu0 %v951
      %970 = vmatpush.msra.mxu0 %v938
      %971 = vmatpush.msra.mxu0 %v936
      %972 = vmatmul.f32.gmra.mxu0 %v948
      %v973 = vpop.f32.mrf.mxu0
      %v974 = vadd.f32 %v945, %v973
      %975 = vdwg.mxu0
      %976 = vmatpush.msra.mxu0 0.0
      %977 = vmatpush.msra.mxu0 0.0
      %978 = vmatpush.msra.mxu0 0.0
      %979 = vmatpush.msra.mxu0 0.0
      %980 = vmatpush.msra.mxu0 0.0
      %981 = vmatpush.msra.mxu0 0.0
      %982 = vmatpush.msra.mxu0 0.0
      %983 = vmatpush.msra.mxu0 0.0
      %984 = vmatpush.msra.mxu0 0.0
      %985 = vmatpush.msra.mxu0 0.0
      %986 = vmatpush.msra.mxu0 0.0
      %987 = vmatpush.msra.mxu0 0.0
      %988 = vmatpush.msra.mxu0 0.0
      %989 = vmatpush.msra.mxu0 %v954
      %990 = vmatpush.msra.mxu0 %v939
      %991 = vmatpush.msra.mxu0 %v937
      %992 = vmatmul.f32.gmra.mxu0 %v948
      %v993 = vpop.f32.mrf.mxu0
      %v994 = vadd.f32 %v945, %v993
      %995 = vdwg.mxu0
      %vm996 = vcmp.ge.f32.partialorder %v974, 0.0
      %vm997 = vcmp.ge.f32.partialorder %v994, 0.0
      %v998 = vmul.f32 %v974, 0.1
      %v999 = vmul.f32 %v994, 0.1
      %v1000 = vsel %vm996, %v974, %v998
      %v1001 = vsel %vm997, %v994, %v999
      %v1004 = vrot.slane %v637, 2
      %v1005 = vrot.slane %v657, 2
      %v1008 = vadd.f32 %v1000, %v1004
      %v1009 = vadd.f32 %v1001, %v1005
      %v1012 = vrot.slane %v1009, 4
      %v1013 = vsel %vm337, %v1008, %v1012
      %v1015 = vadd.f32 %v283, %v1013
      %v1016 = vld [vmem:[%s6] sm:$0xff]
      %v1017 = vld [vmem:[%s6 + $0x8] sm:$0xf]
      %v1018 = vld [vmem:[%s6 + $0xc] sm:$0x3]
      %v1019 = vld [vmem:[%s6 + $0xe] sm:$0x3]
      %1020 = vst [vmem:[#allocation2 + $0x4] sm:$0x33] %v1015
      %v1021 = vld [vmem:[#allocation2] sm:$0x33]
      %v1022 = vld [vmem:[#allocation2 + $0x8] sm:$0x3]
      %v1023 = vmul.f32 %v1021, %v343
      %v1024 = vmul.f32 %v1022, %v341
      %1027 = vst [vmem:[#allocation1] ss:$2 sm:$0xff] %v1023
      %s1028 = scalar_lea.vmem [#allocation1], 16
      %1029 = vst [vmem:[%s1028] ss:$2 sm:$0xff] %v1024
      %v1030 = vld.sshfl [vmem:[#allocation1] sm:$0xff pattern:$0x75316420]
      %v1031 = vld.sshfl [vmem:[#allocation1 + $0x8] sm:$0xff pattern:$0x75316420]
      %v1032 = vld.sshfl [vmem:[#allocation1 + $0x10] sm:$0xff pattern:$0x75316420]
      %1033 = vrot.lane.b32.xlu0 %v1030, 17
      %v1034 = vpop.permute.xlu0 %1033
      %1035 = vrot.lane.b32.xlu0 %v1031, 17
      %v1036 = vpop.permute.xlu0 %1035
      %1037 = vrot.lane.b32.xlu0 %v1032, 17
      %v1038 = vpop.permute.xlu0 %1037
      %v1039 = vsel %vm362, %v1034, %v1036
      %v1040 = vsel %vm362, %v1036, %v1038
      %1043 = vst [vmem:[#allocation3] sm:$0x3] %v1039
      %1044 = vst [vmem:[#allocation3 + $0x8] sm:$0x3] %v1040
      %v1045 = vld [vmem:[#allocation2] sm:$0x33]
      %v1046 = vld [vmem:[#allocation2 + $0x8] sm:$0x3]
      %1049 = vst [vmem:[#allocation1] ss:$2 sm:$0xff] %v1045
      %s1050 = scalar_lea.vmem [#allocation1], 16
      %1051 = vst [vmem:[%s1050] ss:$2 sm:$0xff] %v1046
      %v1052 = vld.sshfl [vmem:[#allocation1] sm:$0xff pattern:$0x75316420]
      %v1053 = vld.sshfl [vmem:[#allocation1 + $0x8] sm:$0xff pattern:$0x75316420]
      %v1054 = vld.sshfl [vmem:[#allocation1 + $0x10] sm:$0xff pattern:$0x75316420]
      %v1055 = vrot.slane %v1052, 6
      %v1056 = vrot.slane %v1053, 6
      %v1057 = vrot.slane %v1054, 6
      %1058 = vrot.lane.b32.xlu0 %v1055, 16
      %v1059 = vpop.permute.xlu0 %1058
      %1060 = vrot.lane.b32.xlu0 %v1056, 16
      %v1061 = vpop.permute.xlu0 %1060
      %1062 = vrot.lane.b32.xlu0 %v1057, 16
      %v1063 = vpop.permute.xlu0 %1062
      %v1064 = vsel %vm388, %v1059, %v1061
      %v1065 = vsel %vm388, %v1061, %v1063
      %1068 = vst [vmem:[#allocation3] sm:$0xc] %v1064
      %1069 = vst [vmem:[#allocation3 + $0x8] sm:$0xc] %v1065
      %v1070 = vld [vmem:[#allocation2] sm:$0x33]
      %v1071 = vld [vmem:[#allocation2 + $0x8] sm:$0x3]
      %v1072 = vmul.f32 %v1070, %v405
      %v1073 = vmul.f32 %v1071, %v403
      %s1076 = scalar_lea.vmem [#allocation1], 1
      %1077 = vst [vmem:[%s1076] ss:$2 sm:$0xff] %v1072
      %s1078 = scalar_lea.vmem [#allocation1], 17
      %1079 = vst [vmem:[%s1078] ss:$2 sm:$0xff] %v1073
      %v1080 = vld.sshfl [vmem:[#allocation1] sm:$0xff pattern:$0x75316420]
      %v1081 = vld.sshfl [vmem:[#allocation1 + $0x8] sm:$0xff pattern:$0x75316420]
      %v1082 = vld.sshfl [vmem:[#allocation1 + $0x10] sm:$0xff pattern:$0x75316420]
      %1083 = vrot.lane.b32.xlu0 %v1080, 15
      %v1084 = vpop.permute.xlu0 %1083
      %1085 = vrot.lane.b32.xlu0 %v1081, 15
      %v1086 = vpop.permute.xlu0 %1085
      %1087 = vrot.lane.b32.xlu0 %v1082, 15
      %v1088 = vpop.permute.xlu0 %1087
      %v1089 = vsel %vm425, %v1084, %v1086
      %v1090 = vsel %vm425, %v1086, %v1088
      %1093 = vst [vmem:[#allocation3] sm:$0x30] %v1089
      %1094 = vst [vmem:[#allocation3 + $0x8] sm:$0x30] %v1090
      %v1095 = vld [vmem:[#allocation2] sm:$0x33]
      %v1096 = vld [vmem:[#allocation2 + $0x8] sm:$0x3]
      %v1097 = vmul.f32 %v1095, %v438
      %v1098 = vmul.f32 %v1096, %v436
      %1101 = vst [vmem:[#allocation1] ss:$2 sm:$0xff] %v1097
      %s1102 = scalar_lea.vmem [#allocation1], 16
      %1103 = vst [vmem:[%s1102] ss:$2 sm:$0xff] %v1098
      %v1104 = vld.sshfl [vmem:[#allocation1] sm:$0xff pattern:$0x75316420]
      %v1105 = vld.sshfl [vmem:[#allocation1 + $0x8] sm:$0xff pattern:$0x75316420]
      %v1106 = vld.sshfl [vmem:[#allocation1 + $0x10] sm:$0xff pattern:$0x75316420]
      %v1107 = vrot.slane %v1104, 2
      %v1108 = vrot.slane %v1105, 2
      %v1109 = vrot.slane %v1106, 2
      %1110 = vrot.lane.b32.xlu0 %v1107, 1
      %v1111 = vpop.permute.xlu0 %1110
      %1112 = vrot.lane.b32.xlu0 %v1108, 1
      %v1113 = vpop.permute.xlu0 %1112
      %1114 = vrot.lane.b32.xlu0 %v1109, 1
      %v1115 = vpop.permute.xlu0 %1114
      %v1116 = vsel %vm460, %v1111, %v1113
      %v1117 = vsel %vm460, %v1113, %v1115
      %1120 = vst [vmem:[#allocation3] sm:$0xc0] %v1116
      %1121 = vst [vmem:[#allocation3 + $0x8] sm:$0xc0] %v1117
      %v1122 = vld [vmem:[#allocation2 + $0x4] sm:$0x33]
      %1124 = vst [vmem:[#allocation1] ss:$2 sm:$0xff] %v1122
      %v1125 = vld.sshfl [vmem:[#allocation1] sm:$0xff pattern:$0x75316420]
      %v1126 = vld.sshfl [vmem:[#allocation1 + $0x8] sm:$0xff pattern:$0x75316420]
      %1129 = vst [vmem:[#allocation3 + $0x10] sm:$0x3] %v1125
      %1130 = vst [vmem:[#allocation3 + $0x18] sm:$0x3] %v1126
      %v1131 = vld [vmem:[#allocation2 + $0x4] sm:$0x33]
      %v1132 = vld [vmem:[#allocation2 + $0xc] sm:$0x3]
      %v1133 = vmul.f32 %v1131, %v481
      %v1134 = vmul.f32 %v1132, %v480
      %1137 = vst [vmem:[#allocation1] ss:$2 sm:$0xff] %v1133
      %s1138 = scalar_lea.vmem [#allocation1], 16
      %1139 = vst [vmem:[%s1138] ss:$2 sm:$0xff] %v1134
      %v1140 = vld.sshfl [vmem:[#allocation1] sm:$0xff pattern:$0x75316420]
      %v1141 = vld.sshfl [vmem:[#allocation1 + $0x8] sm:$0xff pattern:$0x75316420]
      %v1142 = vld.sshfl [vmem:[#allocation1 + $0x10] sm:$0xff pattern:$0x75316420]
      %v1143 = vrot.slane %v1140, 6
      %v1144 = vrot.slane %v1141, 6
      %v1145 = vrot.slane %v1142, 6
      %1146 = vrot.lane.b32.xlu0 %v1143, 127
      %v1147 = vpop.permute.xlu0 %1146
      %1148 = vrot.lane.b32.xlu0 %v1144, 127
      %v1149 = vpop.permute.xlu0 %1148
      %1150 = vrot.lane.b32.xlu0 %v1145, 127
      %v1151 = vpop.permute.xlu0 %1150
      %v1152 = vsel %vm437, %v1147, %v1149
      %v1153 = vsel %vm437, %v1149, %v1151
      %1156 = vst [vmem:[#allocation3 + $0x10] sm:$0xc] %v1152
      %1157 = vst [vmem:[#allocation3 + $0x18] sm:$0xc] %v1153
      %v1158 = vld [vmem:[#allocation2 + $0x4] sm:$0x33]
      %v1159 = vld [vmem:[#allocation2 + $0xc] sm:$0x3]
      %v1160 = vmul.f32 %v1158, %v514
      %v1161 = vmul.f32 %v1159, %v513
      %s1164 = scalar_lea.vmem [#allocation1], 1
      %1165 = vst [vmem:[%s1164] ss:$2 sm:$0xff] %v1160
      %s1166 = scalar_lea.vmem [#allocation1], 17
      %1167 = vst [vmem:[%s1166] ss:$2 sm:$0xff] %v1161
      %v1168 = vld.sshfl [vmem:[#allocation1] sm:$0xff pattern:$0x75316420]
      %v1169 = vld.sshfl [vmem:[#allocation1 + $0x8] sm:$0xff pattern:$0x75316420]
      %v1170 = vld.sshfl [vmem:[#allocation1 + $0x10] sm:$0xff pattern:$0x75316420]
      %1171 = vrot.lane.b32.xlu0 %v1168, 113
      %v1172 = vpop.permute.xlu0 %1171
      %1173 = vrot.lane.b32.xlu0 %v1169, 113
      %v1174 = vpop.permute.xlu0 %1173
      %1175 = vrot.lane.b32.xlu0 %v1170, 113
      %v1176 = vpop.permute.xlu0 %1175
      %v1177 = vsel %vm404, %v1172, %v1174
      %v1178 = vsel %vm404, %v1174, %v1176
      %1181 = vst [vmem:[#allocation3 + $0x10] sm:$0x30] %v1177
      %1182 = vst [vmem:[#allocation3 + $0x18] sm:$0x30] %v1178
      %v1183 = vld [vmem:[#allocation2 + $0x4] sm:$0x33]
      %v1184 = vld [vmem:[#allocation2 + $0xc] sm:$0x3]
      %1187 = vst [vmem:[#allocation1] ss:$2 sm:$0xff] %v1183
      %s1188 = scalar_lea.vmem [#allocation1], 16
      %1189 = vst [vmem:[%s1188] ss:$2 sm:$0xff] %v1184
      %v1190 = vld.sshfl [vmem:[#allocation1] sm:$0xff pattern:$0x75316420]
      %v1191 = vld.sshfl [vmem:[#allocation1 + $0x8] sm:$0xff pattern:$0x75316420]
      %v1192 = vld.sshfl [vmem:[#allocation1 + $0x10] sm:$0xff pattern:$0x75316420]
      %v1193 = vrot.slane %v1190, 2
      %v1194 = vrot.slane %v1191, 2
      %v1195 = vrot.slane %v1192, 2
      %1196 = vrot.lane.b32.xlu0 %v1193, 112
      %v1197 = vpop.permute.xlu0 %1196
      %1198 = vrot.lane.b32.xlu0 %v1194, 112
      %v1199 = vpop.permute.xlu0 %1198
      %1200 = vrot.lane.b32.xlu0 %v1195, 112
      %v1201 = vpop.permute.xlu0 %1200
      %v1202 = vsel %vm559, %v1197, %v1199
      %v1203 = vsel %vm559, %v1199, %v1201
      %1206 = vst [vmem:[#allocation3 + $0x10] sm:$0xc0] %v1202
      %1207 = vst [vmem:[#allocation3 + $0x18] sm:$0xc0] %v1203
      %v1208 = vld [vmem:[#allocation2 + $0x4] sm:$0x33]
      %v1209 = vld [vmem:[#allocation2 + $0xc] sm:$0x3]
      %v1210 = vmul.f32 %v1208, %v571
      %v1211 = vmul.f32 %v1209, %v570
      %1214 = vst [vmem:[#allocation1] ss:$2 sm:$0xff] %v1210
      %s1215 = scalar_lea.vmem [#allocation1], 16
      %1216 = vst [vmem:[%s1215] ss:$2 sm:$0xff] %v1211
      %v1217 = vld.sshfl [vmem:[#allocation1] sm:$0xff pattern:$0x75316420]
      %v1218 = vld.sshfl [vmem:[#allocation1 + $0x8] sm:$0xff pattern:$0x75316420]
      %v1219 = vld.sshfl [vmem:[#allocation1 + $0x10] sm:$0xff pattern:$0x75316420]
      %1220 = vrot.lane.b32.xlu0 %v1217, 111
      %v1221 = vpop.permute.xlu0 %1220
      %1222 = vrot.lane.b32.xlu0 %v1218, 111
      %v1223 = vpop.permute.xlu0 %1222
      %1224 = vrot.lane.b32.xlu0 %v1219, 111
      %v1225 = vpop.permute.xlu0 %1224
      %v1226 = vsel %vm342, %v1221, %v1223
      %v1227 = vsel %vm342, %v1223, %v1225
      %1230 = vst [vmem:[#allocation3 + $0x20] sm:$0x3] %v1226
      %1231 = vst [vmem:[#allocation3 + $0x28] sm:$0x3] %v1227
      %v1232 = vld [vmem:[%s4] sm:$0xff]
      %v1233 = vld [vmem:[#allocation3] sm:$0xff]
      %v1234 = vld [vmem:[#allocation3 + $0x8] sm:$0xff]
      %v1235 = vld [vmem:[#allocation3 + $0x10] sm:$0xff]
      %v1236 = vld [vmem:[#allocation3 + $0x18] sm:$0xff]
      %v1237 = vld [vmem:[#allocation3 + $0x20] sm:$0x3]
      %v1238 = vld [vmem:[#allocation3 + $0x28] sm:$0x3]
      %1240 = vset.pattern.permute.xlu0 0
      %1241 = vperm.xlu0 %1240, %v1016
      %v1242 = vpop.permute.xlu0 %1241
      %v1245 = vsel %vm608, %v1232, 0
      %v1248 = vsel %vm612, %v1237, 0
      %v1251 = vsel %vm612, %v1238, 0
      %1253 = vmatpush.msra.mxu0 0.0
      %1254 = vmatpush.msra.mxu0 0.0
      %1255 = vmatpush.msra.mxu0 0.0
      %1256 = vmatpush.msra.mxu0 0.0
      %1257 = vmatpush.msra.mxu0 0.0
      %1258 = vmatpush.msra.mxu0 0.0
      %1259 = vmatpush.msra.mxu0 0.0
      %1260 = vmatpush.msra.mxu0 0.0
      %1261 = vmatpush.msra.mxu0 0.0
      %1262 = vmatpush.msra.mxu0 0.0
      %1263 = vmatpush.msra.mxu0 0.0
      %1264 = vmatpush.msra.mxu0 0.0
      %1265 = vmatpush.msra.mxu0 0.0
      %1266 = vmatpush.msra.mxu0 %v1248
      %1267 = vmatpush.msra.mxu0 %v1235
      %1268 = vmatpush.msra.mxu0 %v1233
      %1269 = vmatmul.f32.gmra.mxu0 %v1245
      %v1270 = vpop.f32.mrf.mxu0
      %v1271 = vadd.f32 %v1242, %v1270
      %1272 = vdwg.mxu0
      %1273 = vmatpush.msra.mxu0 0.0
      %1274 = vmatpush.msra.mxu0 0.0
      %1275 = vmatpush.msra.mxu0 0.0
      %1276 = vmatpush.msra.mxu0 0.0
      %1277 = vmatpush.msra.mxu0 0.0
      %1278 = vmatpush.msra.mxu0 0.0
      %1279 = vmatpush.msra.mxu0 0.0
      %1280 = vmatpush.msra.mxu0 0.0
      %1281 = vmatpush.msra.mxu0 0.0
      %1282 = vmatpush.msra.mxu0 0.0
      %1283 = vmatpush.msra.mxu0 0.0
      %1284 = vmatpush.msra.mxu0 0.0
      %1285 = vmatpush.msra.mxu0 0.0
      %1286 = vmatpush.msra.mxu0 %v1251
      %1287 = vmatpush.msra.mxu0 %v1236
      %1288 = vmatpush.msra.mxu0 %v1234
      %1289 = vmatmul.f32.gmra.mxu0 %v1245
      %v1290 = vpop.f32.mrf.mxu0
      %v1291 = vadd.f32 %v1242, %v1290
      %1292 = vdwg.mxu0
      %v1293 = vsel %vm612, %v1271, 0.0
      %v1294 = vsel %vm612, %v1291, 0.0
      %v1295 = vadd.f32 %v1293, %v1294
      %1296 = vadd.xlane.f32.xlu0 %v1295
      %v1297 = vpop.xlane.xlu0 %1296
      %v1298 = vmul.f32 %v1297, %v671
      %v1299 = vsub.f32 %v1271, %v1298
      %v1300 = vsub.f32 %v1291, %v1298
      %v1301 = vmul.f32 %v1299, %v1299
      %v1302 = vmul.f32 %v1300, %v1300
      %v1303 = vsel %vm612, %v1301, 0.0
      %v1304 = vsel %vm612, %v1302, 0.0
      %v1305 = vadd.f32 %v1303, %v1304
      %1306 = vadd.xlane.f32.xlu0 %v1305
      %v1307 = vpop.xlane.xlu0 %1306
      %v1308 = vmul.f32 %v1307, %v671
      %v1309 = vadd.f32 %v1308, 1e-05
      %v1310 = vrsqrt.pop %v1309
      %v1311 = vmul.f32 %v1310, %v1309
      %v1312 = vmul.f32 %v1311, %v1310
      %v1313 = vmul.f32 0.5, %v1312
      %v1314 = vsub.f32 1.5, %v1313
      %v1315 = vmul.f32 %v1310, %v1314
      %vm1316 = vweird.f32 %v1309
      %vm1317 = vweird.f32 %v1310
      %vm1318 = vmor %vm1316, %vm1317
      %v1319 = vsel %vm1318, %v1310, %v1315
      %v1320 = vmul.f32 %v1299, %v1319
      %v1321 = vmul.f32 %v1300, %v1319
      %1323 = vset.pattern.permute.xlu0 0
      %1324 = vperm.xlu0 %1323, %v1018
      %v1325 = vpop.permute.xlu0 %1324
      %v1327 = vmul.f32 %v1320, %v1325
      %v1328 = vmul.f32 %v1321, %v1325
      %1330 = vset.pattern.permute.xlu0 0
      %1331 = vperm.xlu0 %1330, %v1019
      %v1332 = vpop.permute.xlu0 %1331
      %v1334 = vadd.f32 %v1327, %v1332
      %v1335 = vadd.f32 %v1328, %v1332
      %v1336 = vsel %vm612, %v1334, %v1271
      %v1337 = vsel %vm612, %v1335, %v1291
      %vm1338 = vcmp.ge.f32.partialorder %v1336, 0.0
      %vm1339 = vcmp.ge.f32.partialorder %v1337, 0.0
      %v1340 = vmul.f32 %v1336, 0.1
      %v1341 = vmul.f32 %v1337, 0.1
      %v1342 = vsel %vm1338, %v1336, %v1340
      %v1343 = vsel %vm1339, %v1337, %v1341
      %v1346 = vrot.slane %v1343, 4
      %v1347 = vsel %vm337, %v1342, %v1346
      %1349 = vst [vmem:[#allocation2 + $0x4] sm:$0xff] %v1347
      %v1350 = vld [vmem:[#allocation2] sm:$0xff]
      %v1351 = vld [vmem:[#allocation2 + $0x8] sm:$0xf]
      %v1352 = vmul.f32 %v1350, %v343
      %v1353 = vmul.f32 %v1351, %v341
      %1356 = vst [vmem:[#allocation1] ss:$2 sm:$0xff] %v1352
      %s1357 = scalar_lea.vmem [#allocation1], 16
      %1358 = vst [vmem:[%s1357] ss:$2 sm:$0xff] %v1353
      %v1359 = vld.sshfl [vmem:[#allocation1] sm:$0xff pattern:$0x75316420]
      %v1360 = vld.sshfl [vmem:[#allocation1 + $0x8] sm:$0xff pattern:$0x75316420]
      %v1361 = vld.sshfl [vmem:[#allocation1 + $0x10] sm:$0xff pattern:$0x75316420]
      %1362 = vrot.lane.b32.xlu0 %v1359, 17
      %v1363 = vpop.permute.xlu0 %1362
      %1364 = vrot.lane.b32.xlu0 %v1360, 17
      %v1365 = vpop.permute.xlu0 %1364
      %1366 = vrot.lane.b32.xlu0 %v1361, 17
      %v1367 = vpop.permute.xlu0 %1366
      %v1368 = vsel %vm362, %v1363, %v1365
      %v1369 = vsel %vm362, %v1365, %v1367
      %1372 = vst [vmem:[#allocation3] sm:$0xf] %v1368
      %1373 = vst [vmem:[#allocation3 + $0x8] sm:$0xf] %v1369
      %v1374 = vld [vmem:[#allocation2] sm:$0xff]
      %v1375 = vld [vmem:[#allocation2 + $0x8] sm:$0xf]
      %s1378 = scalar_lea.vmem [#allocation1], 1
      %1379 = vst [vmem:[%s1378] ss:$2 sm:$0xff] %v1374
      %s1380 = scalar_lea.vmem [#allocation1], 17
      %1381 = vst [vmem:[%s1380] ss:$2 sm:$0xff] %v1375
      %v1382 = vld.sshfl [vmem:[#allocation1] sm:$0xff pattern:$0x75316420]
      %v1383 = vld.sshfl [vmem:[#allocation1 + $0x8] sm:$0xff pattern:$0x75316420]
      %v1384 = vld.sshfl [vmem:[#allocation1 + $0x10] sm:$0xff pattern:$0x75316420]
      %1385 = vrot.lane.b32.xlu0 %v1382, 16
      %v1386 = vpop.permute.xlu0 %1385
      %1387 = vrot.lane.b32.xlu0 %v1383, 16
      %v1388 = vpop.permute.xlu0 %1387
      %1389 = vrot.lane.b32.xlu0 %v1384, 16
      %v1390 = vpop.permute.xlu0 %1389
      %v1391 = vsel %vm388, %v1386, %v1388
      %v1392 = vsel %vm388, %v1388, %v1390
      %1395 = vst [vmem:[#allocation3] sm:$0xf0] %v1391
      %1396 = vst [vmem:[#allocation3 + $0x8] sm:$0xf0] %v1392
      %v1397 = vld [vmem:[#allocation2] sm:$0xff]
      %v1398 = vld [vmem:[#allocation2 + $0x8] sm:$0xf]
      %v1399 = vmul.f32 %v1397, %v405
      %v1400 = vmul.f32 %v1398, %v403
      %1403 = vst [vmem:[#allocation1] ss:$2 sm:$0xff] %v1399
      %s1404 = scalar_lea.vmem [#allocation1], 16
      %1405 = vst [vmem:[%s1404] ss:$2 sm:$0xff] %v1400
      %v1406 = vld.sshfl [vmem:[#allocation1] sm:$0xff pattern:$0x75316420]
      %v1407 = vld.sshfl [vmem:[#allocation1 + $0x8] sm:$0xff pattern:$0x75316420]
      %v1408 = vld.sshfl [vmem:[#allocation1 + $0x10] sm:$0xff pattern:$0x75316420]
      %1409 = vrot.lane.b32.xlu0 %v1406, 15
      %v1410 = vpop.permute.xlu0 %1409
      %1411 = vrot.lane.b32.xlu0 %v1407, 15
      %v1412 = vpop.permute.xlu0 %1411
      %1413 = vrot.lane.b32.xlu0 %v1408, 15
      %v1414 = vpop.permute.xlu0 %1413
      %v1415 = vsel %vm425, %v1410, %v1412
      %v1416 = vsel %vm425, %v1412, %v1414
      %1419 = vst [vmem:[#allocation3 + $0x10] sm:$0xf] %v1415
      %1420 = vst [vmem:[#allocation3 + $0x18] sm:$0xf] %v1416
      %v1421 = vld [vmem:[#allocation2] sm:$0xff]
      %v1422 = vld [vmem:[#allocation2 + $0x8] sm:$0xf]
      %v1423 = vmul.f32 %v1421, %v438
      %v1424 = vmul.f32 %v1422, %v436
      %s1427 = scalar_lea.vmem [#allocation1], 1
      %1428 = vst [vmem:[%s1427] ss:$2 sm:$0xff] %v1423
      %s1429 = scalar_lea.vmem [#allocation1], 17
      %1430 = vst [vmem:[%s1429] ss:$2 sm:$0xff] %v1424
      %v1431 = vld.sshfl [vmem:[#allocation1] sm:$0xff pattern:$0x75316420]
      %v1432 = vld.sshfl [vmem:[#allocation1 + $0x8] sm:$0xff pattern:$0x75316420]
      %v1433 = vld.sshfl [vmem:[#allocation1 + $0x10] sm:$0xff pattern:$0x75316420]
      %1434 = vrot.lane.b32.xlu0 %v1431, 1
      %v1435 = vpop.permute.xlu0 %1434
      %1436 = vrot.lane.b32.xlu0 %v1432, 1
      %v1437 = vpop.permute.xlu0 %1436
      %1438 = vrot.lane.b32.xlu0 %v1433, 1
      %v1439 = vpop.permute.xlu0 %1438
      %v1440 = vsel %vm460, %v1435, %v1437
      %v1441 = vsel %vm460, %v1437, %v1439
      %1444 = vst [vmem:[#allocation3 + $0x10] sm:$0xf0] %v1440
      %1445 = vst [vmem:[#allocation3 + $0x18] sm:$0xf0] %v1441
      %v1446 = vld [vmem:[#allocation2 + $0x4] sm:$0xff]
      %1448 = vst [vmem:[#allocation1] ss:$2 sm:$0xff] %v1446
      %v1449 = vld.sshfl [vmem:[#allocation1] sm:$0xff pattern:$0x75316420]
      %v1450 = vld.sshfl [vmem:[#allocation1 + $0x8] sm:$0xff pattern:$0x75316420]
      %1453 = vst [vmem:[#allocation3 + $0x20] sm:$0xf] %v1449
      %1454 = vst [vmem:[#allocation3 + $0x28] sm:$0xf] %v1450
      %v1455 = vld [vmem:[#allocation2 + $0x4] sm:$0xff]
      %v1456 = vld [vmem:[#allocation2 + $0xc] sm:$0xf]
      %v1457 = vmul.f32 %v1455, %v481
      %v1458 = vmul.f32 %v1456, %v480
      %s1461 = scalar_lea.vmem [#allocation1], 1
      %1462 = vst [vmem:[%s1461] ss:$2 sm:$0xff] %v1457
      %s1463 = scalar_lea.vmem [#allocation1], 17
      %1464 = vst [vmem:[%s1463] ss:$2 sm:$0xff] %v1458
      %v1465 = vld.sshfl [vmem:[#allocation1] sm:$0xff pattern:$0x75316420]
      %v1466 = vld.sshfl [vmem:[#allocation1 + $0x8] sm:$0xff pattern:$0x75316420]
      %v1467 = vld.sshfl [vmem:[#allocation1 + $0x10] sm:$0xff pattern:$0x75316420]
      %1468 = vrot.lane.b32.xlu0 %v1465, 127
      %v1469 = vpop.permute.xlu0 %1468
      %1470 = vrot.lane.b32.xlu0 %v1466, 127
      %v1471 = vpop.permute.xlu0 %1470
      %1472 = vrot.lane.b32.xlu0 %v1467, 127
      %v1473 = vpop.permute.xlu0 %1472
      %v1474 = vsel %vm437, %v1469, %v1471
      %v1475 = vsel %vm437, %v1471, %v1473
      %1478 = vst [vmem:[#allocation3 + $0x20] sm:$0xf0] %v1474
      %1479 = vst [vmem:[#allocation3 + $0x28] sm:$0xf0] %v1475
      %v1480 = vld [vmem:[#allocation2 + $0x4] sm:$0xff]
      %v1481 = vld [vmem:[#allocation2 + $0xc] sm:$0xf]
      %v1482 = vmul.f32 %v1480, %v514
      %v1483 = vmul.f32 %v1481, %v513
      %1486 = vst [vmem:[#allocation1] ss:$2 sm:$0xff] %v1482
      %s1487 = scalar_lea.vmem [#allocation1], 16
      %1488 = vst [vmem:[%s1487] ss:$2 sm:$0xff] %v1483
      %v1489 = vld.sshfl [vmem:[#allocation1] sm:$0xff pattern:$0x75316420]
      %v1490 = vld.sshfl [vmem:[#allocation1 + $0x8] sm:$0xff pattern:$0x75316420]
      %v1491 = vld.sshfl [vmem:[#allocation1 + $0x10] sm:$0xff pattern:$0x75316420]
      %1492 = vrot.lane.b32.xlu0 %v1489, 113
      %v1493 = vpop.permute.xlu0 %1492
      %1494 = vrot.lane.b32.xlu0 %v1490, 113
      %v1495 = vpop.permute.xlu0 %1494
      %1496 = vrot.lane.b32.xlu0 %v1491, 113
      %v1497 = vpop.permute.xlu0 %1496
      %v1498 = vsel %vm404, %v1493, %v1495
      %v1499 = vsel %vm404, %v1495, %v1497
      %1502 = vst [vmem:[#allocation3 + $0x30] sm:$0xf] %v1498
      %1503 = vst [vmem:[#allocation3 + $0x38] sm:$0xf] %v1499
      %v1504 = vld [vmem:[#allocation2 + $0x4] sm:$0xff]
      %v1505 = vld [vmem:[#allocation2 + $0xc] sm:$0xf]
      %s1508 = scalar_lea.vmem [#allocation1], 1
      %1509 = vst [vmem:[%s1508] ss:$2 sm:$0xff] %v1504
      %s1510 = scalar_lea.vmem [#allocation1], 17
      %1511 = vst [vmem:[%s1510] ss:$2 sm:$0xff] %v1505
      %v1512 = vld.sshfl [vmem:[#allocation1] sm:$0xff pattern:$0x75316420]
      %v1513 = vld.sshfl [vmem:[#allocation1 + $0x8] sm:$0xff pattern:$0x75316420]
      %v1514 = vld.sshfl [vmem:[#allocation1 + $0x10] sm:$0xff pattern:$0x75316420]
      %1515 = vrot.lane.b32.xlu0 %v1512, 112
      %v1516 = vpop.permute.xlu0 %1515
      %1517 = vrot.lane.b32.xlu0 %v1513, 112
      %v1518 = vpop.permute.xlu0 %1517
      %1519 = vrot.lane.b32.xlu0 %v1514, 112
      %v1520 = vpop.permute.xlu0 %1519
      %v1521 = vsel %vm559, %v1516, %v1518
      %v1522 = vsel %vm559, %v1518, %v1520
      %1525 = vst [vmem:[#allocation3 + $0x30] sm:$0xf0] %v1521
      %1526 = vst [vmem:[#allocation3 + $0x38] sm:$0xf0] %v1522
      %v1527 = vld [vmem:[#allocation2 + $0x4] sm:$0xff]
      %v1528 = vld [vmem:[#allocation2 + $0xc] sm:$0xf]
      %v1529 = vmul.f32 %v1527, %v571
      %v1530 = vmul.f32 %v1528, %v570
      %1533 = vst [vmem:[#allocation1] ss:$2 sm:$0xff] %v1529
      %s1534 = scalar_lea.vmem [#allocation1], 16
      %1535 = vst [vmem:[%s1534] ss:$2 sm:$0xff] %v1530
      %v1536 = vld.sshfl [vmem:[#allocation1] sm:$0xff pattern:$0x75316420]
      %v1537 = vld.sshfl [vmem:[#allocation1 + $0x8] sm:$0xff pattern:$0x75316420]
      %v1538 = vld.sshfl [vmem:[#allocation1 + $0x10] sm:$0xff pattern:$0x75316420]
      %1539 = vrot.lane.b32.xlu0 %v1536, 111
      %v1540 = vpop.permute.xlu0 %1539
      %1541 = vrot.lane.b32.xlu0 %v1537, 111
      %v1542 = vpop.permute.xlu0 %1541
      %1543 = vrot.lane.b32.xlu0 %v1538, 111
      %v1544 = vpop.permute.xlu0 %1543
      %v1545 = vsel %vm342, %v1540, %v1542
      %v1546 = vsel %vm342, %v1542, %v1544
      %1549 = vst [vmem:[#allocation3 + $0x40] sm:$0xf] %v1545
      %1550 = vst [vmem:[#allocation3 + $0x48] sm:$0xf] %v1546
      %v1551 = vld [vmem:[%s5] sm:$0xf]
      %v1552 = vld [vmem:[#allocation3] sm:$0xff]
      %v1553 = vld [vmem:[#allocation3 + $0x8] sm:$0xff]
      %v1554 = vld [vmem:[#allocation3 + $0x10] sm:$0xff]
      %v1555 = vld [vmem:[#allocation3 + $0x18] sm:$0xff]
      %v1556 = vld [vmem:[#allocation3 + $0x20] sm:$0xff]
      %v1557 = vld [vmem:[#allocation3 + $0x28] sm:$0xff]
      %v1558 = vld [vmem:[#allocation3 + $0x30] sm:$0xff]
      %v1559 = vld [vmem:[#allocation3 + $0x38] sm:$0xff]
      %v1560 = vld [vmem:[#allocation3 + $0x40] sm:$0xf]
      %v1561 = vld [vmem:[#allocation3 + $0x48] sm:$0xf]
      %1563 = vset.pattern.permute.xlu0 0
      %1564 = vperm.xlu0 %1563, %v1017
      %v1565 = vpop.permute.xlu0 %1564
      %vm1567 = vcmask 293888
      %v1569 = vsel %vm1567, %v1551, 0
      %v1572 = vsel %vm337, %v1560, 0
      %v1575 = vsel %vm337, %v1561, 0
      %1577 = vmatpush.msra.mxu0 0.0
      %1578 = vmatpush.msra.mxu0 0.0
      %1579 = vmatpush.msra.mxu0 0.0
      %1580 = vmatpush.msra.mxu0 0.0
      %1581 = vmatpush.msra.mxu0 0.0
      %1582 = vmatpush.msra.mxu0 0.0
      %1583 = vmatpush.msra.mxu0 0.0
      %1584 = vmatpush.msra.mxu0 0.0
      %1585 = vmatpush.msra.mxu0 0.0
      %1586 = vmatpush.msra.mxu0 0.0
      %1587 = vmatpush.msra.mxu0 0.0
      %1588 = vmatpush.msra.mxu0 %v1572
      %1589 = vmatpush.msra.mxu0 %v1558
      %1590 = vmatpush.msra.mxu0 %v1556
      %1591 = vmatpush.msra.mxu0 %v1554
      %1592 = vmatpush.msra.mxu0 %v1552
      %1593 = vmatmul.f32.gmra.mxu0 %v1569
      %v1594 = vpop.f32.mrf.mxu0
      %v1595 = vadd.f32 %v1565, %v1594
      %1596 = vdwg.mxu0
      %1597 = vmatpush.msra.mxu0 0.0
      %1598 = vmatpush.msra.mxu0 0.0
      %1599 = vmatpush.msra.mxu0 0.0
      %1600 = vmatpush.msra.mxu0 0.0
      %1601 = vmatpush.msra.mxu0 0.0
      %1602 = vmatpush.msra.mxu0 0.0
      %1603 = vmatpush.msra.mxu0 0.0
      %1604 = vmatpush.msra.mxu0 0.0
      %1605 = vmatpush.msra.mxu0 0.0
      %1606 = vmatpush.msra.mxu0 0.0
      %1607 = vmatpush.msra.mxu0 0.0
      %1608 = vmatpush.msra.mxu0 %v1575
      %1609 = vmatpush.msra.mxu0 %v1559
      %1610 = vmatpush.msra.mxu0 %v1557
      %1611 = vmatpush.msra.mxu0 %v1555
      %1612 = vmatpush.msra.mxu0 %v1553
      %1613 = vmatmul.f32.gmra.mxu0 %v1569
      %v1614 = vpop.f32.mrf.mxu0
      %v1615 = vadd.f32 %v1565, %v1614
      %1616 = vdwg.mxu0
      %vm1617 = vcmp.ge.f32.partialorder %v1595, 0.0
      %vm1618 = vcmp.ge.f32.partialorder %v1615, 0.0
      %v1619 = vmul.f32 %v1595, 0.1
      %v1620 = vmul.f32 %v1615, 0.1
      %v1621 = vsel %vm1617, %v1595, %v1619
      %v1622 = vsel %vm1618, %v1615, %v1620
      %v1625 = vrot.slane %v1271, 4
      %v1626 = vrot.slane %v1291, 4
      %v1629 = vadd.f32 %v1621, %v1625
      %v1630 = vadd.f32 %v1622, %v1626
      %v1631 = vxor.u32 %v1629, 2147483648
      %v1632 = vxor.u32 %v1630, 2147483648
      %v1633 = vmul.f32 %v1631, 1.442695
      %v1634 = vpow.pop %v1633
      %v1635 = vmul.f32 %v1632, 1.442695
      %v1636 = vpow.pop %v1635
      %v1637 = vadd.f32 %v1634, 1.0
      %v1638 = vadd.f32 %v1636, 1.0
      %v1639 = vrcp.pop %v1637
      %v1640 = vmul.f32 %v1637, %v1639
      %v1641 = vsub.f32 1.0, %v1640
      %v1642 = vmul.f32 %v1639, %v1641
      %v1643 = vadd.f32 %v1639, %v1642
      %vm1644 = vweird.f32 %v1637
      %vm1645 = vweird.f32 %v1639
      %vm1646 = vmor %vm1644, %vm1645
      %v1647 = vsel %vm1646, %v1639, %v1643
      %v1648 = vand.u32 2147483647, %v1637
      %vm1649 = vcmp.eq.f32.partialorder %v1648, 8.507059e+37
      %v1650 = vand.u32 %v1637, 2147483648
      %v1651 = vor.u32 1.1754944e-38, %v1650
      %v1652 = vsel %vm1649, %v1651, %v1647
      %v1653 = vmul.f32 1.0, %v1652
      %v1654 = vrcp.pop %v1638
      %v1655 = vmul.f32 %v1638, %v1654
      %v1656 = vsub.f32 1.0, %v1655
      %v1657 = vmul.f32 %v1654, %v1656
      %v1658 = vadd.f32 %v1654, %v1657
      %vm1659 = vweird.f32 %v1638
      %vm1660 = vweird.f32 %v1654
      %vm1661 = vmor %vm1659, %vm1660
      %v1662 = vsel %vm1661, %v1654, %v1658
      %v1663 = vand.u32 2147483647, %v1638
      %vm1664 = vcmp.eq.f32.partialorder %v1663, 8.507059e+37
      %v1665 = vand.u32 %v1638, 2147483648
      %v1666 = vor.u32 1.1754944e-38, %v1665
      %v1667 = vsel %vm1664, %v1666, %v1662
      %v1668 = vmul.f32 1.0, %v1667
      %v1669 = vmul.f32 %v1653, 2.0
      %v1670 = vmul.f32 %v1668, 2.0
      %v1671 = vsub.f32 %v1669, 1.0
      %v1672 = vsub.f32 %v1670, 1.0
      %v1673 = vmul.f32 %v1671, 0.8
      %v1674 = vmul.f32 %v1672, 0.8
      %v1675 = vmul.f32 %v1673, 1.442695
      %v1676 = vpow.pop %v1675
      %v1677 = vmul.f32 %v1674, 1.442695
      %v1678 = vpow.pop %v1677
      %v1681 = vrot.slane %v1678, 4
      %v1682 = vsel %vm337, %v1676, %v1681
      %v1683 = vrot.slane %v1682, 6
      %v1685 = vmul.f32 %v283, %v1683
      %v1688 = vrot.slane %v1630, 4
      %v1689 = vsel %vm337, %v1629, %v1688
      %v1691 = vadd.f32 %v1685, %v1689
      %1693 = vst [vmem:[#allocation1] ss:$2 sm:$0xff] %v1015
      %v1694 = vld.sshfl [vmem:[#allocation1] sm:$0xff pattern:$0x75316420]
      %v1695 = vld.sshfl [vmem:[#allocation1 + $0x8] sm:$0xff pattern:$0x75316420]
      %1699 = vst [vmem:[#allocation1] ss:$2 sm:$0xff] %v1691
      %v1700 = vld.sshfl [vmem:[#allocation1] sm:$0xff pattern:$0x75316420]
      %v1701 = vld.sshfl [vmem:[#allocation1 + $0x8] sm:$0xff pattern:$0x75316420]
      %v1704 = vsel %vm612, %v1694, %v1700
      %v1705 = vsel %vm612, %v1695, %v1701
      %v1708 = vrot.slane %v1705, 4
      %v1709 = vsel %vm337, %v1704, %v1708
      %v1711 = vadd.f32 %v283, %v1709
      %1712 = vst [vmem:[%s278] sm:$0xff] %v1711
      %p1713 = scmp.lt.s32.totalorder %s18, 1
      %s1714 = scalar_select %p1713, %s18, 1
      %s1715 = smul.addr %s1714, 2
      %s1716 = smul.addr %s1715, 4
      %s1717 = scalar_lea.vmem %s7, %s1716
      // Predicated region
      $region49: #{spa_block.1} parent=47 // pred_check
        %p1718 = pneg %p188
      $region50: #{spa_block.1} parent=47 // pred_check_branch
        %1720 = sbr.rel (%p1718) target = $region52
      $region51: #{spa_block.1} parent=47 // pred_region
        _
      $region52: #{spa_block.1} parent=47 // pred_fallthru
        _
    $region48: #{spa_block.1} parent=5 // pred_fallthru
      _
    %p1721 = scmp.le.s32.totalorder 2, %s13
    // Predicated region
    $region53: #{spa_block.1} parent=5 // pred_check
      %p1722 = pneg %p1721
    $region54: #{spa_block.1} parent=5 // pred_check_branch
      %1724 = sbr.rel (%p1722) target = $region56
    $region55: #{spa_block.1} parent=5 // pred_region
      %s1725 = ssub.s32 %s13, 2
      // Predicated region
      $region57: #{spa_block.1} parent=55 // pred_check
        %p1726 = pneg %p194
      $region58: #{spa_block.1} parent=55 // pred_check_branch
        %1728 = sbr.rel (%p1726) target = $region60
      $region59: #{spa_block.1} parent=55 // pred_region
        %p1729 = scmp.lt.s32.totalorder %s19, 1
        %s1730 = scalar_select %p1729, %s19, 1
        %s1731 = smul.addr %s1730, 2
        %s1732 = smul.addr %s1731, 4
        %s1733 = scalar_lea.vmem %s7, %s1732
      $region60: #{spa_block.1} parent=55 // pred_fallthru
        _
    $region56: #{spa_block.1} parent=5 // pred_fallthru
      _
  $region6: #{spa_block.1} parent=0 // loop_footer
    %s17 = sadd.s32 1, %s13
  $region7: #{spa_block.1} parent=0 // loop_footer_branch
    %12 = sbr.rel target = $region3
  $region8: #{spa_block.1} parent=0 // loop_exit
    _

</llo_original>
